<compile_context>
chip_gen: v6e
topology: v6e:2x2x1
jax: 0.10.0
libtpu: 0.0.40
codegen_flags: <defaults>
</compile_context>

<pallas_src>
import jax
import jax.numpy as jnp
import numpy as np
from jax import lax
from jax.experimental import pallas as pl
from jax.experimental.pallas import tpu as pltpu


def encoder_kernel(x_ref, src_ref, dst_ref, eattr_ref,
                   wn_ref, bn_ref, we_ref, be_ref,
                   wm_ref, bm_ref, ws_ref, wa_ref, bu_ref,
                   out_ref, h_scr, agg_scr):
    et = pl.program_id(0)
    n_et = pl.num_programs(0)
    N = x_ref.shape[0]
    tE = src_ref.shape[1]

    # --- first edge tile: run the node encoder once, zero the aggregator ---
    @pl.when(et == 0)
    def _():
        h_scr[...] = (jnp.dot(x_ref[...], wn_ref[...],
                              preferred_element_type=jnp.float32)
                      + bn_ref[...])
        agg_scr[...] = jnp.zeros_like(agg_scr)

    h = h_scr[...]                                              # [N, Hp]

    # edge_encoder on this edge tile
    e_feat = (jnp.dot(eattr_ref[...], we_ref[...],
                      preferred_element_type=jnp.float32)
              + be_ref[...])                                    # [tE, Hp]

    # One-hots built directly in [N, tE] (lane axis = edges): pure VPU
    # compares, no transpose anywhere.  src/dst are [1, tE] rows broadcast
    # against a dim-0 node iota.  Padded indices (-1) match nothing.
    iota_n = lax.broadcasted_iota(jnp.int32, (N, tE), 0)
    gather_oh = (iota_n == src_ref[...]).astype(jnp.float32)    # [N, tE]
    scatter_oh = (iota_n == dst_ref[...]).astype(jnp.float32)   # [N, tE]

    # Gather h[src]: contract over the node axis (dim 0 of both operands);
    # the MXU handles the transposed contraction directly (no XLU transpose).
    h_src = lax.dot_general(gather_oh, h, (((0,), (0,)), ((), ())),
                            preferred_element_type=jnp.float32)  # [tE, Hp]

    msg = jnp.maximum(
        jnp.dot(h_src + e_feat, wm_ref[...],
                preferred_element_type=jnp.float32) + bm_ref[...],
        0.0)                                                     # [tE, Hp]

    # Scatter-add over dst: plain [N, tE] @ [tE, Hp] on the MXU, accumulated
    # in a resident f32 VMEM scratch across edge tiles.
    agg_scr[...] += jnp.dot(scatter_oh, msg,
                            preferred_element_type=jnp.float32)  # [N, Hp]

    # --- last edge tile: output projection as two dots (no lane-axis concat) ---
    @pl.when(et == n_et - 1)
    def _():
        out = (jnp.dot(h_scr[...], ws_ref[...],
                       preferred_element_type=jnp.float32)
               + jnp.dot(agg_scr[...], wa_ref[...],
                         preferred_element_type=jnp.float32)
               + bu_ref[...])
        out_ref[...] = jnp.maximum(out, 0.0)


def _pad2(a, rows, cols):
    r, c = a.shape
    return jnp.pad(a, ((0, rows - r), (0, cols - c)))


def encoder_forward(x, edge_index, edge_attr, params, *, edge_tile=512):
    x = x.astype(jnp.float32)
    edge_attr = edge_attr.astype(jnp.float32)
    N, DIN = x.shape
    E = edge_index.shape[1]
    EIN = edge_attr.shape[1]
    H = params["W_node"].shape[1]

    # Lane-dense hidden dim (multiple of 128) and sublane-aligned node axis.
    H_pad = pl.cdiv(H, 128) * 128
    N_pad = pl.cdiv(N, 8) * 8

    # Edge tile: as large as edge_tile allows but never larger than the
    # 128-rounded edge count, so small graphs get grid=(1,).
    tE = min(edge_tile, pl.cdiv(E, 128) * 128)
    E_pad = pl.cdiv(E, tE) * tE

    # Pad nodes (zeros, outputs sliced off) and edges (index -1, zero feats).
    if N_pad != N:
        x = jnp.pad(x, ((0, N_pad - N), (0, 0)))
    src = edge_index[0, :].astype(jnp.int32)
    dst = edge_index[1, :].astype(jnp.int32)
    pad_e = E_pad - E
    if pad_e:
        src = jnp.concatenate([src, jnp.full((pad_e,), -1, jnp.int32)])
        dst = jnp.concatenate([dst, jnp.full((pad_e,), -1, jnp.int32)])
        edge_attr = jnp.concatenate(
            [edge_attr, jnp.zeros((pad_e, EIN), jnp.float32)], axis=0)
    src = src.reshape(1, E_pad)    # lane-dense rows
    dst = dst.reshape(1, E_pad)

    # Zero-pad all weight columns / biases to H_pad (padded lanes stay exactly
    # zero through relu, so slicing [:, :H] at the end recovers the result).
    wn = _pad2(params["W_node"], DIN, H_pad)
    we = _pad2(params["W_edge"], EIN, H_pad)
    wm = _pad2(params["W_msg"], H_pad, H_pad)
    ws = _pad2(params["W_self"], H_pad, H_pad)
    wa = _pad2(params["W_agg"], H_pad, H_pad)
    bn = _pad2(params["b_node"], 1, H_pad)
    be = _pad2(params["b_edge"], 1, H_pad)
    bm = _pad2(params["b_msg"], 1, H_pad)
    bu = _pad2(params["b_upd"], 1, H_pad)

    def full_spec(arr):
        nd = arr.ndim
        return pl.BlockSpec(arr.shape, lambda *_: (0,) * nd)

    # Rough VMEM budget (double-buffered inputs + resident scratch + output),
    # so larger tiles stay explicit about their footprint (v7x: 64 MiB phys).
    param_bytes = sum(int(np.prod(a.shape)) * 4
                      for a in (wn, bn, we, be, wm, bm, ws, wa, bu))
    per_step_bytes = tE * EIN * 4 + 2 * tE * 4
    scratch_bytes = 2 * N_pad * H_pad * 4
    total_bytes = (2 * per_step_bytes + 2 * (param_bytes + N_pad * DIN * 4
                                             + N_pad * H_pad * 4)
                   + scratch_bytes)
    vmem_limit = max(32 * 1024 * 1024, int(1.5 * total_bytes))

    grid = (E_pad // tE,)
    out = pl.pallas_call(
        encoder_kernel,
        out_shape=jax.ShapeDtypeStruct((N_pad, H_pad), jnp.float32),
        grid_spec=pltpu.PrefetchScalarGridSpec(
            num_scalar_prefetch=0,
            grid=grid,
            in_specs=[
                full_spec(x),                                   # x  [N_pad, DIN]
                pl.BlockSpec((1, tE), lambda e: (0, e)),        # src [1, E_pad]
                pl.BlockSpec((1, tE), lambda e: (0, e)),        # dst [1, E_pad]
                pl.BlockSpec((tE, EIN), lambda e: (e, 0)),      # edge_attr
                full_spec(wn), full_spec(bn),
                full_spec(we), full_spec(be),
                full_spec(wm), full_spec(bm),
                full_spec(ws), full_spec(wa), full_spec(bu),
            ],
            out_specs=pl.BlockSpec((N_pad, H_pad), lambda e: (0, 0)),
            scratch_shapes=[pltpu.VMEM((N_pad, H_pad), jnp.float32),   # h
                            pltpu.VMEM((N_pad, H_pad), jnp.float32)],  # agg
        ),
        compiler_params=pltpu.CompilerParams(
            dimension_semantics=("arbitrary",),                 # edge axis = reduction
            vmem_limit_bytes=vmem_limit),
    )(x, src, dst, edge_attr, wn, bn, we, be, wm, bm, ws, wa, bu)

    return out[:N, :H]


def reference_forward(x, edge_index, edge_attr, params):
    x = x.astype(jnp.float32)
    edge_attr = edge_attr.astype(jnp.float32)
    h = x @ params["W_node"] + params["b_node"]
    e = edge_attr @ params["W_edge"] + params["b_edge"]
    src = edge_index[0]
    dst = edge_index[1]
    msg = jnp.maximum((h[src] + e) @ params["W_msg"] + params["b_msg"], 0.0)
    agg = jnp.zeros_like(h).at[dst].add(msg)
    out = h @ params["W_self"] + agg @ params["W_agg"] + params["b_upd"]
    return jnp.maximum(out, 0.0)


if __name__ == "__main__":
    N, E = 64, 250             # nodes, edges (E not a multiple of 128 -> exercises padding)
    DIN, EIN, H = 16, 16, 32   # node feat dim, edge feat dim, hidden dim

    key = jax.random.PRNGKey(0)
    ks = jax.random.split(key, 12)

    x = jax.random.normal(ks[0], (N, DIN), dtype=jnp.float32)
    edge_attr = jax.random.normal(ks[1], (E, EIN), dtype=jnp.float32)
    edge_index = jnp.stack([
        jax.random.randint(ks[2], (E,), 0, N),
        jax.random.randint(ks[3], (E,), 0, N),
    ], axis=0).astype(jnp.int32)

    def lin(k, fan_in, fan_out):
        return (jax.random.normal(k, (fan_in, fan_out), dtype=jnp.float32)
                / jnp.sqrt(jnp.float32(fan_in)))

    params = {
        "W_node": lin(ks[4], DIN, H), "b_node": jnp.full((1, H), 0.01, jnp.float32),
        "W_edge": lin(ks[5], EIN, H), "b_edge": jnp.full((1, H), 0.02, jnp.float32),
        "W_msg":  lin(ks[6], H, H),   "b_msg":  jnp.full((1, H), 0.03, jnp.float32),
        "W_self": lin(ks[7], H, H),
        "W_agg":  lin(ks[8], H, H),   "b_upd":  jnp.full((1, H), 0.04, jnp.float32),
    }

    out = encoder_forward(x, edge_index, edge_attr, params)
    out = jax.block_until_ready(out)

    ref = reference_forward(x, edge_index, edge_attr, params)
    np.testing.assert_allclose(np.asarray(out), np.asarray(ref),
                               rtol=2e-5, atol=2e-5)

    print("KERNEL_OK")
</pallas_src>

<mosaic_0001>
module attributes {stable_mosaic.version = 11 : i64} {
  func.func @encoder_kernel(%arg0: i32, %arg1: memref<64x16xf32, #tpu.memory_space<vmem>>, %arg2: memref<1x256xi32, #tpu.memory_space<vmem>>, %arg3: memref<1x256xi32, #tpu.memory_space<vmem>>, %arg4: memref<256x16xf32, #tpu.memory_space<vmem>>, %arg5: memref<16x128xf32, #tpu.memory_space<vmem>>, %arg6: memref<1x128xf32, #tpu.memory_space<vmem>>, %arg7: memref<16x128xf32, #tpu.memory_space<vmem>>, %arg8: memref<1x128xf32, #tpu.memory_space<vmem>>, %arg9: memref<128x128xf32, #tpu.memory_space<vmem>>, %arg10: memref<1x128xf32, #tpu.memory_space<vmem>>, %arg11: memref<128x128xf32, #tpu.memory_space<vmem>>, %arg12: memref<128x128xf32, #tpu.memory_space<vmem>>, %arg13: memref<1x128xf32, #tpu.memory_space<vmem>>, %arg14: memref<64x128xf32, #tpu.memory_space<vmem>>, %arg15: memref<64x128xf32, #tpu.memory_space<vmem>>, %arg16: memref<64x128xf32, #tpu.memory_space<vmem>>) attributes {dimension_semantics = [#tpu.dimension_semantics<arbitrary>], iteration_bounds = array<i64: 1>, scalar_prefetch = 0 : i64, scratch_operands = 2 : i64, tpu.core_type = #tpu.core_type<tc>, window_params = [{pipeline_mode = #tpu.pipeline_mode<synchronous>, transform_indices = @transform_0, window_bounds = array<i64: 64, 16>}, {transform_indices = @transform_1, window_bounds = array<i64: 1, 256>}, {transform_indices = @transform_2, window_bounds = array<i64: 1, 256>}, {transform_indices = @transform_3, window_bounds = array<i64: 256, 16>}, {pipeline_mode = #tpu.pipeline_mode<synchronous>, transform_indices = @transform_4, window_bounds = array<i64: 16, 128>}, {pipeline_mode = #tpu.pipeline_mode<synchronous>, transform_indices = @transform_5, window_bounds = array<i64: 1, 128>}, {pipeline_mode = #tpu.pipeline_mode<synchronous>, transform_indices = @transform_6, window_bounds = array<i64: 16, 128>}, {pipeline_mode = #tpu.pipeline_mode<synchronous>, transform_indices = @transform_7, window_bounds = array<i64: 1, 128>}, {pipeline_mode = #tpu.pipeline_mode<synchronous>, transform_indices = @transform_8, window_bounds = array<i64: 128, 128>}, {pipeline_mode = #tpu.pipeline_mode<synchronous>, transform_indices = @transform_9, window_bounds = array<i64: 1, 128>}, {pipeline_mode = #tpu.pipeline_mode<synchronous>, transform_indices = @transform_10, window_bounds = array<i64: 128, 128>}, {pipeline_mode = #tpu.pipeline_mode<synchronous>, transform_indices = @transform_11, window_bounds = array<i64: 128, 128>}, {pipeline_mode = #tpu.pipeline_mode<synchronous>, transform_indices = @transform_12, window_bounds = array<i64: 1, 128>}, {pipeline_mode = #tpu.pipeline_mode<synchronous>, transform_indices = @transform_13, window_bounds = array<i64: 64, 128>}]} {
    %c0_i32 = arith.constant 0 : i32
    %0 = arith.cmpi eq, %arg0, %c0_i32 : i32
    %1 = arith.extui %0 : i1 to i32
    %c0_i32_0 = arith.constant 0 : i32
    %2 = arith.cmpi ne, %1, %c0_i32_0 : i32
    scf.if %2 {
      %c0_26 = arith.constant 0 : index
      %c0_27 = arith.constant 0 : index
      %37 = vector.load %arg1[%c0_26, %c0_27] : memref<64x16xf32, #tpu.memory_space<vmem>>, vector<64x16xf32>
      %c0_28 = arith.constant 0 : index
      %c0_29 = arith.constant 0 : index
      %38 = vector.load %arg5[%c0_28, %c0_29] : memref<16x128xf32, #tpu.memory_space<vmem>>, vector<16x128xf32>
      %cst_30 = arith.constant dense<0.000000e+00> : vector<64x128xf32>
      %39 = tpu.matmul %37, %38, %cst_30 {dimension_numbers = #tpu.dot_dimension_numbers<[1], [0], [0], [1], [0, 0, 1, 1], [], []>} : vector<64x16xf32>, vector<16x128xf32>, vector<64x128xf32> -> vector<64x128xf32>
      %c0_31 = arith.constant 0 : index
      %c0_32 = arith.constant 0 : index
      %40 = vector.load %arg6[%c0_31, %c0_32] : memref<1x128xf32, #tpu.memory_space<vmem>>, vector<1x128xf32>
      %41 = vector.broadcast %40 : vector<1x128xf32> to vector<64x128xf32>
      %42 = arith.addf %39, %41 : vector<64x128xf32>
      %c0_33 = arith.constant 0 : index
      %c0_34 = arith.constant 0 : index
      %43 = vector.load %arg15[%c0_33, %c0_34] : memref<64x128xf32, #tpu.memory_space<vmem>>, vector<64x128xf32>
      tpu.vector_store %arg15[%c0_33, %c0_34], %42 {strides = array<i32>} : memref<64x128xf32, #tpu.memory_space<vmem>>, vector<64x128xf32>,
      %cst_35 = arith.constant 0.000000e+00 : f32
      %44 = vector.broadcast %cst_35 : f32 to vector<64x128xf32>
      %c0_36 = arith.constant 0 : index
      %c0_37 = arith.constant 0 : index
      %45 = vector.load %arg16[%c0_36, %c0_37] : memref<64x128xf32, #tpu.memory_space<vmem>>, vector<64x128xf32>
      tpu.vector_store %arg16[%c0_36, %c0_37], %44 {strides = array<i32>} : memref<64x128xf32, #tpu.memory_space<vmem>>, vector<64x128xf32>,
    } else {
    }
    %c0 = arith.constant 0 : index
    %c0_1 = arith.constant 0 : index
    %3 = vector.load %arg15[%c0, %c0_1] : memref<64x128xf32, #tpu.memory_space<vmem>>, vector<64x128xf32>
    %c0_2 = arith.constant 0 : index
    %c0_3 = arith.constant 0 : index
    %4 = vector.load %arg4[%c0_2, %c0_3] : memref<256x16xf32, #tpu.memory_space<vmem>>, vector<256x16xf32>
    %c0_4 = arith.constant 0 : index
    %c0_5 = arith.constant 0 : index
    %5 = vector.load %arg7[%c0_4, %c0_5] : memref<16x128xf32, #tpu.memory_space<vmem>>, vector<16x128xf32>
    %cst = arith.constant dense<0.000000e+00> : vector<256x128xf32>
    %6 = tpu.matmul %4, %5, %cst {dimension_numbers = #tpu.dot_dimension_numbers<[1], [0], [0], [1], [0, 0, 1, 1], [], []>} : vector<256x16xf32>, vector<16x128xf32>, vector<256x128xf32> -> vector<256x128xf32>
    %c0_6 = arith.constant 0 : index
    %c0_7 = arith.constant 0 : index
    %7 = vector.load %arg8[%c0_6, %c0_7] : memref<1x128xf32, #tpu.memory_space<vmem>>, vector<1x128xf32>
    %8 = vector.broadcast %7 : vector<1x128xf32> to vector<256x128xf32>
    %9 = arith.addf %6, %8 : vector<256x128xf32>
    %10 = tpu.iota {dimensions = array<i32: 0>} : vector<64x256xi32>
    %c0_8 = arith.constant 0 : index
    %c0_9 = arith.constant 0 : index
    %11 = vector.load %arg2[%c0_8, %c0_9] : memref<1x256xi32, #tpu.memory_space<vmem>>, vector<1x256xi32>
    %12 = vector.broadcast %11 : vector<1x256xi32> to vector<64x256xi32>
    %13 = arith.cmpi eq, %10, %12 : vector<64x256xi32>
    %14 = arith.extui %13 : vector<64x256xi1> to vector<64x256xi32>
    %15 = arith.sitofp %14 : vector<64x256xi32> to vector<64x256xf32>
    %c0_10 = arith.constant 0 : index
    %c0_11 = arith.constant 0 : index
    %16 = vector.load %arg3[%c0_10, %c0_11] : memref<1x256xi32, #tpu.memory_space<vmem>>, vector<1x256xi32>
    %17 = vector.broadcast %16 : vector<1x256xi32> to vector<64x256xi32>
    %18 = arith.cmpi eq, %10, %17 : vector<64x256xi32>
    %19 = arith.extui %18 : vector<64x256xi1> to vector<64x256xi32>
    %20 = arith.sitofp %19 : vector<64x256xi32> to vector<64x256xf32>
    %cst_12 = arith.constant dense<0.000000e+00> : vector<256x128xf32>
    %21 = tpu.matmul %15, %3, %cst_12 {dimension_numbers = #tpu.dot_dimension_numbers<[0], [0], [1], [1], [0, 1, 1, 1], [], []>} : vector<64x256xf32>, vector<64x128xf32>, vector<256x128xf32> -> vector<256x128xf32>
    %22 = arith.addf %21, %9 : vector<256x128xf32>
    %c0_13 = arith.constant 0 : index
    %c0_14 = arith.constant 0 : index
    %23 = vector.load %arg9[%c0_13, %c0_14] : memref<128x128xf32, #tpu.memory_space<vmem>>, vector<128x128xf32>
    %cst_15 = arith.constant dense<0.000000e+00> : vector<256x128xf32>
    %24 = tpu.matmul %22, %23, %cst_15 {dimension_numbers = #tpu.dot_dimension_numbers<[1], [0], [0], [1], [0, 0, 1, 1], [], []>} : vector<256x128xf32>, vector<128x128xf32>, vector<256x128xf32> -> vector<256x128xf32>
    %c0_16 = arith.constant 0 : index
    %c0_17 = arith.constant 0 : index
    %25 = vector.load %arg10[%c0_16, %c0_17] : memref<1x128xf32, #tpu.memory_space<vmem>>, vector<1x128xf32>
    %26 = vector.broadcast %25 : vector<1x128xf32> to vector<256x128xf32>
    %27 = arith.addf %24, %26 : vector<256x128xf32>
    %cst_18 = arith.constant 0.000000e+00 : f32
    %28 = vector.broadcast %cst_18 : f32 to vector<256x128xf32>
    %29 = arith.maximumf %27, %28 : vector<256x128xf32>
    %c0_19 = arith.constant 0 : index
    %c0_20 = arith.constant 0 : index
    %30 = vector.load %arg16[%c0_19, %c0_20] : memref<64x128xf32, #tpu.memory_space<vmem>>, vector<64x128xf32>
    %cst_21 = arith.constant dense<0.000000e+00> : vector<64x128xf32>
    %31 = tpu.matmul %20, %29, %cst_21 {dimension_numbers = #tpu.dot_dimension_numbers<[1], [0], [0], [1], [0, 0, 1, 1], [], []>} : vector<64x256xf32>, vector<256x128xf32>, vector<64x128xf32> -> vector<64x128xf32>
    %32 = arith.addf %30, %31 : vector<64x128xf32>
    %c0_22 = arith.constant 0 : index
    %c0_23 = arith.constant 0 : index
    %33 = vector.load %arg16[%c0_22, %c0_23] : memref<64x128xf32, #tpu.memory_space<vmem>>, vector<64x128xf32>
    tpu.vector_store %arg16[%c0_22, %c0_23], %32 {strides = array<i32>} : memref<64x128xf32, #tpu.memory_space<vmem>>, vector<64x128xf32>,
    %c0_i32_24 = arith.constant 0 : i32
    %34 = arith.cmpi eq, %arg0, %c0_i32_24 : i32
    %35 = arith.extui %34 : i1 to i32
    %c0_i32_25 = arith.constant 0 : i32
    %36 = arith.cmpi ne, %35, %c0_i32_25 : i32
    scf.if %36 {
      %c0_26 = arith.constant 0 : index
      %c0_27 = arith.constant 0 : index
      %37 = vector.load %arg15[%c0_26, %c0_27] : memref<64x128xf32, #tpu.memory_space<vmem>>, vector<64x128xf32>
      %c0_28 = arith.constant 0 : index
      %c0_29 = arith.constant 0 : index
      %38 = vector.load %arg11[%c0_28, %c0_29] : memref<128x128xf32, #tpu.memory_space<vmem>>, vector<128x128xf32>
      %cst_30 = arith.constant dense<0.000000e+00> : vector<64x128xf32>
      %39 = tpu.matmul %37, %38, %cst_30 {dimension_numbers = #tpu.dot_dimension_numbers<[1], [0], [0], [1], [0, 0, 1, 1], [], []>} : vector<64x128xf32>, vector<128x128xf32>, vector<64x128xf32> -> vector<64x128xf32>
      %c0_31 = arith.constant 0 : index
      %c0_32 = arith.constant 0 : index
      %40 = vector.load %arg16[%c0_31, %c0_32] : memref<64x128xf32, #tpu.memory_space<vmem>>, vector<64x128xf32>
      %c0_33 = arith.constant 0 : index
      %c0_34 = arith.constant 0 : index
      %41 = vector.load %arg12[%c0_33, %c0_34] : memref<128x128xf32, #tpu.memory_space<vmem>>, vector<128x128xf32>
      %cst_35 = arith.constant dense<0.000000e+00> : vector<64x128xf32>
      %42 = tpu.matmul %40, %41, %cst_35 {dimension_numbers = #tpu.dot_dimension_numbers<[1], [0], [0], [1], [0, 0, 1, 1], [], []>} : vector<64x128xf32>, vector<128x128xf32>, vector<64x128xf32> -> vector<64x128xf32>
      %43 = arith.addf %39, %42 : vector<64x128xf32>
      %c0_36 = arith.constant 0 : index
      %c0_37 = arith.constant 0 : index
      %44 = vector.load %arg13[%c0_36, %c0_37] : memref<1x128xf32, #tpu.memory_space<vmem>>, vector<1x128xf32>
      %45 = vector.broadcast %44 : vector<1x128xf32> to vector<64x128xf32>
      %46 = arith.addf %43, %45 : vector<64x128xf32>
      %cst_38 = arith.constant 0.000000e+00 : f32
      %47 = vector.broadcast %cst_38 : f32 to vector<64x128xf32>
      %48 = arith.maximumf %46, %47 : vector<64x128xf32>
      %c0_39 = arith.constant 0 : index
      %c0_40 = arith.constant 0 : index
      %49 = vector.load %arg14[%c0_39, %c0_40] : memref<64x128xf32, #tpu.memory_space<vmem>>, vector<64x128xf32>
      tpu.vector_store %arg14[%c0_39, %c0_40], %48 {strides = array<i32>} : memref<64x128xf32, #tpu.memory_space<vmem>>, vector<64x128xf32>,
    } else {
    }
    return
  }
  func.func @transform_0(%arg0: i32) -> (i32, i32) {
    %c0_i32 = arith.constant 0 : i32
    %c0_i32_0 = arith.constant 0 : i32
    %c0_i32_1 = arith.constant 0 : i32
    return %c0_i32, %c0_i32_0 : i32, i32
  }
  func.func @transform_1(%arg0: i32) -> (i32, i32) {
    %c0_i32 = arith.constant 0 : i32
    %c0_i32_0 = arith.constant 0 : i32
    return %c0_i32, %arg0 : i32, i32
  }
  func.func @transform_2(%arg0: i32) -> (i32, i32) {
    %c0_i32 = arith.constant 0 : i32
    %c0_i32_0 = arith.constant 0 : i32
    return %c0_i32, %arg0 : i32, i32
  }
  func.func @transform_3(%arg0: i32) -> (i32, i32) {
    %c0_i32 = arith.constant 0 : i32
    %c0_i32_0 = arith.constant 0 : i32
    return %arg0, %c0_i32 : i32, i32
  }
  func.func @transform_4(%arg0: i32) -> (i32, i32) {
    %c0_i32 = arith.constant 0 : i32
    %c0_i32_0 = arith.constant 0 : i32
    %c0_i32_1 = arith.constant 0 : i32
    return %c0_i32, %c0_i32_0 : i32, i32
  }
  func.func @transform_5(%arg0: i32) -> (i32, i32) {
    %c0_i32 = arith.constant 0 : i32
    %c0_i32_0 = arith.constant 0 : i32
    %c0_i32_1 = arith.constant 0 : i32
    return %c0_i32, %c0_i32_0 : i32, i32
  }
  func.func @transform_6(%arg0: i32) -> (i32, i32) {
    %c0_i32 = arith.constant 0 : i32
    %c0_i32_0 = arith.constant 0 : i32
    %c0_i32_1 = arith.constant 0 : i32
    return %c0_i32, %c0_i32_0 : i32, i32
  }
  func.func @transform_7(%arg0: i32) -> (i32, i32) {
    %c0_i32 = arith.constant 0 : i32
    %c0_i32_0 = arith.constant 0 : i32
    %c0_i32_1 = arith.constant 0 : i32
    return %c0_i32, %c0_i32_0 : i32, i32
  }
  func.func @transform_8(%arg0: i32) -> (i32, i32) {
    %c0_i32 = arith.constant 0 : i32
    %c0_i32_0 = arith.constant 0 : i32
    %c0_i32_1 = arith.constant 0 : i32
    return %c0_i32, %c0_i32_0 : i32, i32
  }
  func.func @transform_9(%arg0: i32) -> (i32, i32) {
    %c0_i32 = arith.constant 0 : i32
    %c0_i32_0 = arith.constant 0 : i32
    %c0_i32_1 = arith.constant 0 : i32
    return %c0_i32, %c0_i32_0 : i32, i32
  }
  func.func @transform_10(%arg0: i32) -> (i32, i32) {
    %c0_i32 = arith.constant 0 : i32
    %c0_i32_0 = arith.constant 0 : i32
    %c0_i32_1 = arith.constant 0 : i32
    return %c0_i32, %c0_i32_0 : i32, i32
  }
  func.func @transform_11(%arg0: i32) -> (i32, i32) {
    %c0_i32 = arith.constant 0 : i32
    %c0_i32_0 = arith.constant 0 : i32
    %c0_i32_1 = arith.constant 0 : i32
    return %c0_i32, %c0_i32_0 : i32, i32
  }
  func.func @transform_12(%arg0: i32) -> (i32, i32) {
    %c0_i32 = arith.constant 0 : i32
    %c0_i32_0 = arith.constant 0 : i32
    %c0_i32_1 = arith.constant 0 : i32
    return %c0_i32, %c0_i32_0 : i32, i32
  }
  func.func @transform_13(%arg0: i32) -> (i32, i32) {
    %c0_i32 = arith.constant 0 : i32
    %c0_i32_0 = arith.constant 0 : i32
    %c0_i32_1 = arith.constant 0 : i32
    return %c0_i32, %c0_i32_0 : i32, i32
  }
}

</mosaic_0001>

<llo_original>
// kernel: tpu_custom_call.1
$region0: #{tpu_custom_call.1}
  #allocation0 [shape = 'u32[]', space=smem, size = 0x4, offset = 0x4, fixed_abs, tag = 'smem constant byte address 0x4 - core index']
  #allocation1 [shape = 'u32[144,128]{1,0:T(1,128)}', space=vmem, size = 0x12000, scoped, tag = 'internal scratch']
  #allocation2 [shape = 'f32[64,128]{1,0:T(8,128)}', space=vmem, size = 0x8000, scoped, tag = 'scratch operand']
  #allocation3 [shape = 'f32[64,128]{1,0:T(8,128)}', space=vmem, size = 0x8000, scoped, tag = 'scratch operand']
  %s0 = inlined_call_operand.vmem [shape: f32[64,16], index: 0, kind: input, shape index: {}]
  %s1 = inlined_call_operand.hbm [shape: s32[1,256], index: 1, kind: input, shape index: {}]
  %s2 = inlined_call_operand.hbm [shape: s32[1,256], index: 2, kind: input, shape index: {}]
  %s3 = inlined_call_operand.vmem [shape: f32[256,16], index: 3, kind: input, shape index: {}]
  %s4 = inlined_call_operand.hbm [shape: f32[16,128], index: 4, kind: input, shape index: {}]
  %s5 = inlined_call_operand.hbm [shape: f32[1,128], index: 5, kind: input, shape index: {}]
  %s6 = inlined_call_operand.hbm [shape: f32[16,128], index: 6, kind: input, shape index: {}]
  %s7 = inlined_call_operand.hbm [shape: f32[1,128], index: 7, kind: input, shape index: {}]
  %s8 = inlined_call_operand.vmem [shape: f32[128,128], index: 8, kind: input, shape index: {}]
  %s9 = inlined_call_operand.hbm [shape: f32[1,128], index: 9, kind: input, shape index: {}]
  %s10 = inlined_call_operand.vmem [shape: f32[128,128], index: 10, kind: input, shape index: {}]
  %s11 = inlined_call_operand.vmem [shape: f32[128,128], index: 11, kind: input, shape index: {}]
  %s12 = inlined_call_operand.vmem [shape: f32[1,128], index: 12, kind: input, shape index: {}]
  %s13 = inlined_call_operand.hbm [shape: f32[64,128], index: 13, kind: output, shape index: {}]
  %s14 = sld [smem:[#allocation0]]
  $region98: #{tpu_custom_call.1} parent=0
    _
  %s16 = ssub.s32 1, %s14
  %s17 = scalar_select 0, %s16, %s14
  $region1: #{tpu_custom_call.1} parent=0
    #allocation4 [shape = 'u8[1024]{0}', space=vmem, size = 0x400, scoped, tag = 'input window, operand 1, single buffered']
    #allocation5 [shape = 's32[1]{0}', space=sflag, size = 0x4, scoped, tag = 'scoped memory for tpu_custom_call.1']
    #allocation6 [shape = 's32[1]{0}', space=sflag, size = 0x4, scoped, tag = 'scoped memory for tpu_custom_call.1']
    #allocation7 [shape = 'u8[1024]{0}', space=vmem, size = 0x400, scoped, tag = 'input window, operand 2, single buffered']
    #allocation8 [shape = 's32[1]{0}', space=sflag, size = 0x4, scoped, tag = 'scoped memory for tpu_custom_call.1']
    #allocation9 [shape = 'u8[8192]{0}', space=vmem, size = 0x2000, scoped, tag = 'input window, operand 4, single buffered']
    #allocation10 [shape = 'u8[512]{0}', space=vmem, size = 0x400, scoped, tag = 'input window, operand 5, single buffered']
    #allocation11 [shape = 's32[1]{0}', space=sflag, size = 0x4, scoped, tag = 'scoped memory for tpu_custom_call.1']
    #allocation12 [shape = 'u8[8192]{0}', space=vmem, size = 0x2000, scoped, tag = 'input window, operand 6, single buffered']
    #allocation13 [shape = 'u8[512]{0}', space=vmem, size = 0x400, scoped, tag = 'input window, operand 7, single buffered']
    #allocation14 [shape = 's32[1]{0}', space=sflag, size = 0x4, scoped, tag = 'scoped memory for tpu_custom_call.1']
    #allocation15 [shape = 'u8[512]{0}', space=vmem, size = 0x400, scoped, tag = 'input window, operand 9, single buffered']
    #allocation16 [shape = 'u8[32768]{0}', space=vmem, size = 0x8000, scoped, tag = 'output window, operand 0, single buffered']
    %18 = vsyncpa [#allocation5], 0
    %19 = vsyncpa [#allocation8], 0
    %20 = vsyncpa [#allocation11], 0
    %21 = vsyncpa [#allocation14], 0
    %22 = vsyncpa [#allocation6], 0
    // Predicated region
    $region2: #{tpu_custom_call.1} parent=1 // pred_check
      _
    $region3: #{tpu_custom_call.1} parent=1 // pred_check_branch
      %24 = sbr.rel (0) target = $region5
    $region4: #{tpu_custom_call.1} parent=1 // pred_region
      _
    $region5: #{tpu_custom_call.1} parent=1 // pred_fallthru
      _
    // Predicated region
    $region6: #{tpu_custom_call.1} parent=1 // pred_check
      _
    $region7: #{tpu_custom_call.1} parent=1 // pred_check_branch
      %26 = sbr.rel (0) target = $region9
    $region8: #{tpu_custom_call.1} parent=1 // pred_region
      %s28 = ssub.s32 32, 32
      %29 = vsyncadd [#allocation5], %s28
      %s31 = sshll.u32 [#allocation4], 4
      %s32 = int_to_ptr.vmem [resolvable:$true] %s31
      %34 = dma.hbm_to_vmem [thread:$0]  %s1, 32, %s32, [#allocation5]
    $region9: #{tpu_custom_call.1} parent=1 // pred_fallthru
      _
    // Predicated region
    $region10: #{tpu_custom_call.1} parent=1 // pred_check
      _
    $region11: #{tpu_custom_call.1} parent=1 // pred_check_branch
      %36 = sbr.rel (0) target = $region13
    $region12: #{tpu_custom_call.1} parent=1 // pred_region
      %s38 = ssub.s32 32, 32
      %39 = vsyncadd [#allocation8], %s38
      %s41 = sshll.u32 [#allocation7], 4
      %s42 = int_to_ptr.vmem [resolvable:$true] %s41
      %44 = dma.hbm_to_vmem [thread:$0]  %s2, 32, %s42, [#allocation8]
    $region13: #{tpu_custom_call.1} parent=1 // pred_fallthru
      _
    // Predicated region
    $region14: #{tpu_custom_call.1} parent=1 // pred_check
      _
    $region15: #{tpu_custom_call.1} parent=1 // pred_check_branch
      %46 = sbr.rel (0) target = $region17
    $region16: #{tpu_custom_call.1} parent=1 // pred_region
      _
    $region17: #{tpu_custom_call.1} parent=1 // pred_fallthru
      _
    // Predicated region
    $region18: #{tpu_custom_call.1} parent=1 // pred_check
      _
    $region19: #{tpu_custom_call.1} parent=1 // pred_check_branch
      %48 = sbr.rel (0) target = $region21
    $region20: #{tpu_custom_call.1} parent=1 // pred_region
      %s50 = ssub.s32 256, 256
      %51 = vsyncadd [#allocation8], %s50
      %s52 = sshll.u32 [#allocation9], 4
      %s53 = int_to_ptr.vmem [resolvable:$true] %s52
      %58 = dma.hbm_to_vmem [thread:$0]  %s4, 256, %s53, [#allocation8], 128, 128, 8
    $region21: #{tpu_custom_call.1} parent=1 // pred_fallthru
      _
    // Predicated region
    $region22: #{tpu_custom_call.1} parent=1 // pred_check
      _
    $region23: #{tpu_custom_call.1} parent=1 // pred_check_branch
      %60 = sbr.rel (0) target = $region25
    $region24: #{tpu_custom_call.1} parent=1 // pred_region
      %s62 = ssub.s32 16, 16
      %63 = vsyncadd [#allocation11], %s62
      %s65 = sshll.u32 [#allocation10], 4
      %s66 = int_to_ptr.vmem [resolvable:$true] %s65
      %68 = dma.hbm_to_vmem [thread:$0]  %s5, 16, %s66, [#allocation11]
    $region25: #{tpu_custom_call.1} parent=1 // pred_fallthru
      _
    // Predicated region
    $region26: #{tpu_custom_call.1} parent=1 // pred_check
      _
    $region27: #{tpu_custom_call.1} parent=1 // pred_check_branch
      %70 = sbr.rel (0) target = $region29
    $region28: #{tpu_custom_call.1} parent=1 // pred_region
      %s72 = ssub.s32 256, 256
      %73 = vsyncadd [#allocation11], %s72
      %s74 = sshll.u32 [#allocation12], 4
      %s75 = int_to_ptr.vmem [resolvable:$true] %s74
      %80 = dma.hbm_to_vmem [thread:$0]  %s6, 256, %s75, [#allocation11], 128, 128, 8
    $region29: #{tpu_custom_call.1} parent=1 // pred_fallthru
      _
    // Predicated region
    $region30: #{tpu_custom_call.1} parent=1 // pred_check
      _
    $region31: #{tpu_custom_call.1} parent=1 // pred_check_branch
      %82 = sbr.rel (0) target = $region33
    $region32: #{tpu_custom_call.1} parent=1 // pred_region
      %s84 = ssub.s32 16, 16
      %85 = vsyncadd [#allocation14], %s84
      %s87 = sshll.u32 [#allocation13], 4
      %s88 = int_to_ptr.vmem [resolvable:$true] %s87
      %90 = dma.hbm_to_vmem [thread:$0]  %s7, 16, %s88, [#allocation14]
    $region33: #{tpu_custom_call.1} parent=1 // pred_fallthru
      _
    // Predicated region
    $region34: #{tpu_custom_call.1} parent=1 // pred_check
      _
    $region35: #{tpu_custom_call.1} parent=1 // pred_check_branch
      %92 = sbr.rel (0) target = $region37
    $region36: #{tpu_custom_call.1} parent=1 // pred_region
      _
    $region37: #{tpu_custom_call.1} parent=1 // pred_fallthru
      _
    // Predicated region
    $region38: #{tpu_custom_call.1} parent=1 // pred_check
      _
    $region39: #{tpu_custom_call.1} parent=1 // pred_check_branch
      %94 = sbr.rel (0) target = $region41
    $region40: #{tpu_custom_call.1} parent=1 // pred_region
      %s96 = ssub.s32 16, 16
      %97 = vsyncadd [#allocation14], %s96
      %s99 = sshll.u32 [#allocation15], 4
      %s100 = int_to_ptr.vmem [resolvable:$true] %s99
      %102 = dma.hbm_to_vmem [thread:$0]  %s9, 16, %s100, [#allocation14]
    $region41: #{tpu_custom_call.1} parent=1 // pred_fallthru
      _
    // Predicated region
    $region42: #{tpu_custom_call.1} parent=1 // pred_check
      _
    $region43: #{tpu_custom_call.1} parent=1 // pred_check_branch
      %104 = sbr.rel (0) target = $region45
    $region44: #{tpu_custom_call.1} parent=1 // pred_region
      _
    $region45: #{tpu_custom_call.1} parent=1 // pred_fallthru
      _
    // Predicated region
    $region46: #{tpu_custom_call.1} parent=1 // pred_check
      _
    $region47: #{tpu_custom_call.1} parent=1 // pred_check_branch
      %106 = sbr.rel (0) target = $region49
    $region48: #{tpu_custom_call.1} parent=1 // pred_region
      _
    $region49: #{tpu_custom_call.1} parent=1 // pred_fallthru
      _
    // Predicated region
    $region50: #{tpu_custom_call.1} parent=1 // pred_check
      _
    $region51: #{tpu_custom_call.1} parent=1 // pred_check_branch
      %108 = sbr.rel (0) target = $region53
    $region52: #{tpu_custom_call.1} parent=1 // pred_region
      _
    $region53: #{tpu_custom_call.1} parent=1 // pred_fallthru
      _
    // Predicated region
    $region54: #{tpu_custom_call.1} parent=1 // pred_check
      _
    $region55: #{tpu_custom_call.1} parent=1 // pred_check_branch
      %110 = sbr.rel (0) target = $region57
    $region56: #{tpu_custom_call.1} parent=1 // pred_region
      %111 = dma.done [#allocation5], 32
    $region57: #{tpu_custom_call.1} parent=1 // pred_fallthru
      _
    // Predicated region
    $region58: #{tpu_custom_call.1} parent=1 // pred_check
      _
    $region59: #{tpu_custom_call.1} parent=1 // pred_check_branch
      %113 = sbr.rel (0) target = $region61
    $region60: #{tpu_custom_call.1} parent=1 // pred_region
      %114 = dma.done [#allocation8], 32
    $region61: #{tpu_custom_call.1} parent=1 // pred_fallthru
      _
    // Predicated region
    $region62: #{tpu_custom_call.1} parent=1 // pred_check
      _
    $region63: #{tpu_custom_call.1} parent=1 // pred_check_branch
      %116 = sbr.rel (0) target = $region65
    $region64: #{tpu_custom_call.1} parent=1 // pred_region
      %117 = dma.done [#allocation8], 256
    $region65: #{tpu_custom_call.1} parent=1 // pred_fallthru
      _
    // Predicated region
    $region66: #{tpu_custom_call.1} parent=1 // pred_check
      _
    $region67: #{tpu_custom_call.1} parent=1 // pred_check_branch
      %119 = sbr.rel (0) target = $region69
    $region68: #{tpu_custom_call.1} parent=1 // pred_region
      %120 = dma.done [#allocation11], 16
    $region69: #{tpu_custom_call.1} parent=1 // pred_fallthru
      _
    // Predicated region
    $region70: #{tpu_custom_call.1} parent=1 // pred_check
      _
    $region71: #{tpu_custom_call.1} parent=1 // pred_check_branch
      %122 = sbr.rel (0) target = $region73
    $region72: #{tpu_custom_call.1} parent=1 // pred_region
      %123 = dma.done [#allocation11], 256
    $region73: #{tpu_custom_call.1} parent=1 // pred_fallthru
      _
    // Predicated region
    $region74: #{tpu_custom_call.1} parent=1 // pred_check
      _
    $region75: #{tpu_custom_call.1} parent=1 // pred_check_branch
      %125 = sbr.rel (0) target = $region77
    $region76: #{tpu_custom_call.1} parent=1 // pred_region
      %126 = dma.done [#allocation14], 16
    $region77: #{tpu_custom_call.1} parent=1 // pred_fallthru
      _
    // Predicated region
    $region78: #{tpu_custom_call.1} parent=1 // pred_check
      _
    $region79: #{tpu_custom_call.1} parent=1 // pred_check_branch
      %128 = sbr.rel (0) target = $region81
    $region80: #{tpu_custom_call.1} parent=1 // pred_region
      %129 = dma.done [#allocation14], 16
    $region81: #{tpu_custom_call.1} parent=1 // pred_fallthru
      _
    %p130 = scmp.eq.s32.totalorder 0, 0
    // Predicated region
    $region82: #{tpu_custom_call.1} parent=1 // pred_check
      %p131 = pneg %p130
    $region83: #{tpu_custom_call.1} parent=1 // pred_check_branch
      %133 = sbr.rel (%p131) target = $region85
    $region84: #{tpu_custom_call.1} parent=1 // pred_region
      %v134 = vld [vmem:[%s0] sm:$0xff]
      %v135 = vld [vmem:[%s0 + $0x8] sm:$0xff]
      %v136 = vld [vmem:[%s0 + $0x10] sm:$0xff]
      %v137 = vld [vmem:[%s0 + $0x18] sm:$0xff]
      %v138 = vld [vmem:[%s0 + $0x20] sm:$0xff]
      %v139 = vld [vmem:[%s0 + $0x28] sm:$0xff]
      %v140 = vld [vmem:[%s0 + $0x30] sm:$0xff]
      %v141 = vld [vmem:[%s0 + $0x38] sm:$0xff]
      %v142 = vld [vmem:[#allocation9] sm:$0xff]
      %v143 = vld [vmem:[#allocation9 + $0x8] sm:$0xff]
      %v144 = vld [vmem:[#allocation10] sm:$0x1]
      %v146 = vlaneseq
      %v147 = vshrl.u32 %v146, 7
      %v148 = vsub.s32 0, %v147
      %v149 = vrot.slane %v144, %v148
      %vm151 = vcmask 130048
      %v153 = vsel %vm151, %v134, 0
      %v156 = vsel %vm151, %v135, 0
      %v159 = vsel %vm151, %v136, 0
      %v162 = vsel %vm151, %v137, 0
      %v165 = vsel %vm151, %v138, 0
      %v168 = vsel %vm151, %v139, 0
      %v171 = vsel %vm151, %v140, 0
      %v174 = vsel %vm151, %v141, 0
      %176 = vmatprep.subr.mxu0 0.0
      %177 = vmatpush1.msra.mxu0 0.0
      %178 = vmatprep.subr.mxu0 0.0
      %179 = vmatpush1.msra.mxu0 0.0
      %180 = vmatprep.subr.mxu0 0.0
      %181 = vmatpush1.msra.mxu0 0.0
      %182 = vmatprep.subr.mxu0 0.0
      %183 = vmatpush1.msra.mxu0 0.0
      %184 = vmatprep.subr.mxu0 0.0
      %185 = vmatpush1.msra.mxu0 0.0
      %186 = vmatprep.subr.mxu0 0.0
      %187 = vmatpush1.msra.mxu0 0.0
      %188 = vmatprep.subr.mxu0 0.0
      %189 = vmatpush1.msra.mxu0 0.0
      %190 = vmatprep.subr.mxu0 0.0
      %191 = vmatpush1.msra.mxu0 0.0
      %192 = vmatprep.subr.mxu0 0.0
      %193 = vmatpush1.msra.mxu0 0.0
      %194 = vmatprep.subr.mxu0 0.0
      %195 = vmatpush1.msra.mxu0 0.0
      %196 = vmatprep.subr.mxu0 0.0
      %197 = vmatpush1.msra.mxu0 0.0
      %198 = vmatprep.subr.mxu0 0.0
      %199 = vmatpush1.msra.mxu0 0.0
      %200 = vmatprep.subr.mxu0 0.0
      %201 = vmatpush1.msra.mxu0 0.0
      %202 = vmatprep.subr.mxu0 0.0
      %203 = vmatpush1.msra.mxu0 0.0
      %204 = vmatprep.subr.mxu0 0.0
      %205 = vmatpush1.msra.mxu0 %v143
      %206 = vmatprep.subr.mxu0 0.0
      %207 = vmatpush1.msra.mxu0 %v142
      %208 = vmatprep.subr.mxu0 0.0
      %209 = vmatpush2.msra.mxu0 0.0
      %210 = vmatprep.subr.mxu0 0.0
      %211 = vmatpush2.msra.mxu0 0.0
      %212 = vmatprep.subr.mxu0 0.0
      %213 = vmatpush2.msra.mxu0 0.0
      %214 = vmatprep.subr.mxu0 0.0
      %215 = vmatpush2.msra.mxu0 0.0
      %216 = vmatprep.subr.mxu0 0.0
      %217 = vmatpush2.msra.mxu0 0.0
      %218 = vmatprep.subr.mxu0 0.0
      %219 = vmatpush2.msra.mxu0 0.0
      %220 = vmatprep.subr.mxu0 0.0
      %221 = vmatpush2.msra.mxu0 0.0
      %222 = vmatprep.subr.mxu0 0.0
      %223 = vmatpush2.msra.mxu0 0.0
      %224 = vmatprep.subr.mxu0 0.0
      %225 = vmatpush2.msra.mxu0 0.0
      %226 = vmatprep.subr.mxu0 0.0
      %227 = vmatpush2.msra.mxu0 0.0
      %228 = vmatprep.subr.mxu0 0.0
      %229 = vmatpush2.msra.mxu0 0.0
      %230 = vmatprep.subr.mxu0 0.0
      %231 = vmatpush2.msra.mxu0 0.0
      %232 = vmatprep.subr.mxu0 0.0
      %233 = vmatpush2.msra.mxu0 0.0
      %234 = vmatprep.subr.mxu0 0.0
      %235 = vmatpush2.msra.mxu0 0.0
      %236 = vmatprep.subr.mxu0 0.0
      %237 = vmatpush2.msra.mxu0 0.0
      %238 = vmatprep.subr.mxu0 0.0
      %239 = vmatpush2.msra.mxu0 0.0
      %240 = vmatprep.mubr.f32.mxu0 0.0
      %241 = vmatmul.mubr.f32.gmra.mxu0 %v153
      %v242 = vpop.f32.mrf.mxu0
      %v243 = vadd.f32 %v149, %v242
      %v244 = vpop.f32.mrf.mxu0
      %245 = vmatprep.mubr.f32.mxu0 0.0
      %246 = vmatmul.mubr.f32.gmra.mxu0 %v156
      %v247 = vpop.f32.mrf.mxu0
      %v248 = vadd.f32 %v149, %v247
      %v249 = vpop.f32.mrf.mxu0
      %250 = vmatprep.mubr.f32.mxu0 0.0
      %251 = vmatmul.mubr.f32.gmra.mxu0 %v159
      %v252 = vpop.f32.mrf.mxu0
      %v253 = vadd.f32 %v149, %v252
      %v254 = vpop.f32.mrf.mxu0
      %255 = vmatprep.mubr.f32.mxu0 0.0
      %256 = vmatmul.mubr.f32.gmra.mxu0 %v162
      %v257 = vpop.f32.mrf.mxu0
      %v258 = vadd.f32 %v149, %v257
      %v259 = vpop.f32.mrf.mxu0
      %260 = vmatprep.mubr.f32.mxu0 0.0
      %261 = vmatmul.mubr.f32.gmra.mxu0 %v165
      %v262 = vpop.f32.mrf.mxu0
      %v263 = vadd.f32 %v149, %v262
      %v264 = vpop.f32.mrf.mxu0
      %265 = vmatprep.mubr.f32.mxu0 0.0
      %266 = vmatmul.mubr.f32.gmra.mxu0 %v168
      %v267 = vpop.f32.mrf.mxu0
      %v268 = vadd.f32 %v149, %v267
      %v269 = vpop.f32.mrf.mxu0
      %270 = vmatprep.mubr.f32.mxu0 0.0
      %271 = vmatmul.mubr.f32.gmra.mxu0 %v171
      %v272 = vpop.f32.mrf.mxu0
      %v273 = vadd.f32 %v149, %v272
      %v274 = vpop.f32.mrf.mxu0
      %275 = vmatprep.mubr.f32.mxu0 0.0
      %276 = vmatmul.mubr.f32.gmra.mxu0 %v174
      %v277 = vpop.f32.mrf.mxu0
      %v278 = vadd.f32 %v149, %v277
      %v279 = vpop.f32.mrf.mxu0
      %280 = vdwg.mxu0
      %281 = vst [vmem:[#allocation2] sm:$0xff] %v243
      %282 = vst [vmem:[#allocation2 + $0x8] sm:$0xff] %v248
      %283 = vst [vmem:[#allocation2 + $0x10] sm:$0xff] %v253
      %284 = vst [vmem:[#allocation2 + $0x18] sm:$0xff] %v258
      %285 = vst [vmem:[#allocation2 + $0x20] sm:$0xff] %v263
      %286 = vst [vmem:[#allocation2 + $0x28] sm:$0xff] %v268
      %287 = vst [vmem:[#allocation2 + $0x30] sm:$0xff] %v273
      %288 = vst [vmem:[#allocation2 + $0x38] sm:$0xff] %v278
      %289 = vst [vmem:[#allocation3] sm:$0xff] 0.0
      %290 = vst [vmem:[#allocation3 + $0x8] sm:$0xff] 0.0
      %291 = vst [vmem:[#allocation3 + $0x10] sm:$0xff] 0.0
      %292 = vst [vmem:[#allocation3 + $0x18] sm:$0xff] 0.0
      %293 = vst [vmem:[#allocation3 + $0x20] sm:$0xff] 0.0
      %294 = vst [vmem:[#allocation3 + $0x28] sm:$0xff] 0.0
      %295 = vst [vmem:[#allocation3 + $0x30] sm:$0xff] 0.0
      %296 = vst [vmem:[#allocation3 + $0x38] sm:$0xff] 0.0
    $region85: #{tpu_custom_call.1} parent=1 // pred_fallthru
      _
    %v297 = vld [vmem:[#allocation2] sm:$0xff]
    %v298 = vld [vmem:[#allocation2 + $0x8] sm:$0xff]
    %v299 = vld [vmem:[#allocation2 + $0x10] sm:$0xff]
    %v300 = vld [vmem:[#allocation2 + $0x18] sm:$0xff]
    %v301 = vld [vmem:[#allocation2 + $0x20] sm:$0xff]
    %v302 = vld [vmem:[#allocation2 + $0x28] sm:$0xff]
    %v303 = vld [vmem:[#allocation2 + $0x30] sm:$0xff]
    %v304 = vld [vmem:[#allocation2 + $0x38] sm:$0xff]
    %v305 = vld [vmem:[%s3] sm:$0xff]
    %v306 = vld [vmem:[%s3 + $0x8] sm:$0xff]
    %v307 = vld [vmem:[%s3 + $0x10] sm:$0xff]
    %v308 = vld [vmem:[%s3 + $0x18] sm:$0xff]
    %v309 = vld [vmem:[%s3 + $0x20] sm:$0xff]
    %v310 = vld [vmem:[%s3 + $0x28] sm:$0xff]
    %v311 = vld [vmem:[%s3 + $0x30] sm:$0xff]
    %v312 = vld [vmem:[%s3 + $0x38] sm:$0xff]
    %v313 = vld [vmem:[%s3 + $0x40] sm:$0xff]
    %v314 = vld [vmem:[%s3 + $0x48] sm:$0xff]
    %v315 = vld [vmem:[%s3 + $0x50] sm:$0xff]
    %v316 = vld [vmem:[%s3 + $0x58] sm:$0xff]
    %v317 = vld [vmem:[%s3 + $0x60] sm:$0xff]
    %v318 = vld [vmem:[%s3 + $0x68] sm:$0xff]
    %v319 = vld [vmem:[%s3 + $0x70] sm:$0xff]
    %v320 = vld [vmem:[%s3 + $0x78] sm:$0xff]
    %v321 = vld [vmem:[%s3 + $0x80] sm:$0xff]
    %v322 = vld [vmem:[%s3 + $0x88] sm:$0xff]
    %v323 = vld [vmem:[%s3 + $0x90] sm:$0xff]
    %v324 = vld [vmem:[%s3 + $0x98] sm:$0xff]
    %v325 = vld [vmem:[%s3 + $0xa0] sm:$0xff]
    %v326 = vld [vmem:[%s3 + $0xa8] sm:$0xff]
    %v327 = vld [vmem:[%s3 + $0xb0] sm:$0xff]
    %v328 = vld [vmem:[%s3 + $0xb8] sm:$0xff]
    %v329 = vld [vmem:[%s3 + $0xc0] sm:$0xff]
    %v330 = vld [vmem:[%s3 + $0xc8] sm:$0xff]
    %v331 = vld [vmem:[%s3 + $0xd0] sm:$0xff]
    %v332 = vld [vmem:[%s3 + $0xd8] sm:$0xff]
    %v333 = vld [vmem:[%s3 + $0xe0] sm:$0xff]
    %v334 = vld [vmem:[%s3 + $0xe8] sm:$0xff]
    %v335 = vld [vmem:[%s3 + $0xf0] sm:$0xff]
    %v336 = vld [vmem:[%s3 + $0xf8] sm:$0xff]
    %v337 = vld [vmem:[#allocation12] sm:$0xff]
    %v338 = vld [vmem:[#allocation12 + $0x8] sm:$0xff]
    %v339 = vld [vmem:[#allocation13] sm:$0x1]
    %v341 = vlaneseq
    %v342 = vshrl.u32 %v341, 7
    %v343 = vsub.s32 0, %v342
    %v344 = vrot.slane %v339, %v343
    %vm346 = vcmask 130048
    %v348 = vsel %vm346, %v305, 0
    %v351 = vsel %vm346, %v306, 0
    %v354 = vsel %vm346, %v307, 0
    %v357 = vsel %vm346, %v308, 0
    %v360 = vsel %vm346, %v309, 0
    %v363 = vsel %vm346, %v310, 0
    %v366 = vsel %vm346, %v311, 0
    %v369 = vsel %vm346, %v312, 0
    %v372 = vsel %vm346, %v313, 0
    %v375 = vsel %vm346, %v314, 0
    %v378 = vsel %vm346, %v315, 0
    %v381 = vsel %vm346, %v316, 0
    %v384 = vsel %vm346, %v317, 0
    %v387 = vsel %vm346, %v318, 0
    %v390 = vsel %vm346, %v319, 0
    %v393 = vsel %vm346, %v320, 0
    %v396 = vsel %vm346, %v321, 0
    %v399 = vsel %vm346, %v322, 0
    %v402 = vsel %vm346, %v323, 0
    %v405 = vsel %vm346, %v324, 0
    %v408 = vsel %vm346, %v325, 0
    %v411 = vsel %vm346, %v326, 0
    %v414 = vsel %vm346, %v327, 0
    %v417 = vsel %vm346, %v328, 0
    %v420 = vsel %vm346, %v329, 0
    %v423 = vsel %vm346, %v330, 0
    %v426 = vsel %vm346, %v331, 0
    %v429 = vsel %vm346, %v332, 0
    %v432 = vsel %vm346, %v333, 0
    %v435 = vsel %vm346, %v334, 0
    %v438 = vsel %vm346, %v335, 0
    %v441 = vsel %vm346, %v336, 0
    %443 = vmatprep.subr.mxu0 0.0
    %444 = vmatpush1.msra.mxu0 0.0
    %445 = vmatprep.subr.mxu0 0.0
    %446 = vmatpush1.msra.mxu0 0.0
    %447 = vmatprep.subr.mxu0 0.0
    %448 = vmatpush1.msra.mxu0 0.0
    %449 = vmatprep.subr.mxu0 0.0
    %450 = vmatpush1.msra.mxu0 0.0
    %451 = vmatprep.subr.mxu0 0.0
    %452 = vmatpush1.msra.mxu0 0.0
    %453 = vmatprep.subr.mxu0 0.0
    %454 = vmatpush1.msra.mxu0 0.0
    %455 = vmatprep.subr.mxu0 0.0
    %456 = vmatpush1.msra.mxu0 0.0
    %457 = vmatprep.subr.mxu0 0.0
    %458 = vmatpush1.msra.mxu0 0.0
    %459 = vmatprep.subr.mxu0 0.0
    %460 = vmatpush1.msra.mxu0 0.0
    %461 = vmatprep.subr.mxu0 0.0
    %462 = vmatpush1.msra.mxu0 0.0
    %463 = vmatprep.subr.mxu0 0.0
    %464 = vmatpush1.msra.mxu0 0.0
    %465 = vmatprep.subr.mxu0 0.0
    %466 = vmatpush1.msra.mxu0 0.0
    %467 = vmatprep.subr.mxu0 0.0
    %468 = vmatpush1.msra.mxu0 0.0
    %469 = vmatprep.subr.mxu0 0.0
    %470 = vmatpush1.msra.mxu0 0.0
    %471 = vmatprep.subr.mxu0 0.0
    %472 = vmatpush1.msra.mxu0 %v338
    %473 = vmatprep.subr.mxu0 0.0
    %474 = vmatpush1.msra.mxu0 %v337
    %475 = vmatprep.subr.mxu0 0.0
    %476 = vmatpush2.msra.mxu0 0.0
    %477 = vmatprep.subr.mxu0 0.0
    %478 = vmatpush2.msra.mxu0 0.0
    %479 = vmatprep.subr.mxu0 0.0
    %480 = vmatpush2.msra.mxu0 0.0
    %481 = vmatprep.subr.mxu0 0.0
    %482 = vmatpush2.msra.mxu0 0.0
    %483 = vmatprep.subr.mxu0 0.0
    %484 = vmatpush2.msra.mxu0 0.0
    %485 = vmatprep.subr.mxu0 0.0
    %486 = vmatpush2.msra.mxu0 0.0
    %487 = vmatprep.subr.mxu0 0.0
    %488 = vmatpush2.msra.mxu0 0.0
    %489 = vmatprep.subr.mxu0 0.0
    %490 = vmatpush2.msra.mxu0 0.0
    %491 = vmatprep.subr.mxu0 0.0
    %492 = vmatpush2.msra.mxu0 0.0
    %493 = vmatprep.subr.mxu0 0.0
    %494 = vmatpush2.msra.mxu0 0.0
    %495 = vmatprep.subr.mxu0 0.0
    %496 = vmatpush2.msra.mxu0 0.0
    %497 = vmatprep.subr.mxu0 0.0
    %498 = vmatpush2.msra.mxu0 0.0
    %499 = vmatprep.subr.mxu0 0.0
    %500 = vmatpush2.msra.mxu0 0.0
    %501 = vmatprep.subr.mxu0 0.0
    %502 = vmatpush2.msra.mxu0 0.0
    %503 = vmatprep.subr.mxu0 0.0
    %504 = vmatpush2.msra.mxu0 0.0
    %505 = vmatprep.subr.mxu0 0.0
    %506 = vmatpush2.msra.mxu0 0.0
    %507 = vmatprep.mubr.f32.mxu0 0.0
    %508 = vmatmul.mubr.f32.gmra.mxu0 %v348
    %v509 = vpop.f32.mrf.mxu0
    %v510 = vadd.f32 %v344, %v509
    %v511 = vpop.f32.mrf.mxu0
    %512 = vmatprep.mubr.f32.mxu0 0.0
    %513 = vmatmul.mubr.f32.gmra.mxu0 %v351
    %v514 = vpop.f32.mrf.mxu0
    %v515 = vadd.f32 %v344, %v514
    %v516 = vpop.f32.mrf.mxu0
    %517 = vmatprep.mubr.f32.mxu0 0.0
    %518 = vmatmul.mubr.f32.gmra.mxu0 %v354
    %v519 = vpop.f32.mrf.mxu0
    %v520 = vadd.f32 %v344, %v519
    %v521 = vpop.f32.mrf.mxu0
    %522 = vmatprep.mubr.f32.mxu0 0.0
    %523 = vmatmul.mubr.f32.gmra.mxu0 %v357
    %v524 = vpop.f32.mrf.mxu0
    %v525 = vadd.f32 %v344, %v524
    %v526 = vpop.f32.mrf.mxu0
    %527 = vmatprep.mubr.f32.mxu0 0.0
    %528 = vmatmul.mubr.f32.gmra.mxu0 %v360
    %v529 = vpop.f32.mrf.mxu0
    %v530 = vadd.f32 %v344, %v529
    %v531 = vpop.f32.mrf.mxu0
    %532 = vmatprep.mubr.f32.mxu0 0.0
    %533 = vmatmul.mubr.f32.gmra.mxu0 %v363
    %v534 = vpop.f32.mrf.mxu0
    %v535 = vadd.f32 %v344, %v534
    %v536 = vpop.f32.mrf.mxu0
    %537 = vmatprep.mubr.f32.mxu0 0.0
    %538 = vmatmul.mubr.f32.gmra.mxu0 %v366
    %v539 = vpop.f32.mrf.mxu0
    %v540 = vadd.f32 %v344, %v539
    %v541 = vpop.f32.mrf.mxu0
    %542 = vmatprep.mubr.f32.mxu0 0.0
    %543 = vmatmul.mubr.f32.gmra.mxu0 %v369
    %v544 = vpop.f32.mrf.mxu0
    %v545 = vadd.f32 %v344, %v544
    %v546 = vpop.f32.mrf.mxu0
    %547 = vmatprep.mubr.f32.mxu0 0.0
    %548 = vmatmul.mubr.f32.gmra.mxu0 %v372
    %v549 = vpop.f32.mrf.mxu0
    %v550 = vadd.f32 %v344, %v549
    %v551 = vpop.f32.mrf.mxu0
    %552 = vmatprep.mubr.f32.mxu0 0.0
    %553 = vmatmul.mubr.f32.gmra.mxu0 %v375
    %v554 = vpop.f32.mrf.mxu0
    %v555 = vadd.f32 %v344, %v554
    %v556 = vpop.f32.mrf.mxu0
    %557 = vmatprep.mubr.f32.mxu0 0.0
    %558 = vmatmul.mubr.f32.gmra.mxu0 %v378
    %v559 = vpop.f32.mrf.mxu0
    %v560 = vadd.f32 %v344, %v559
    %v561 = vpop.f32.mrf.mxu0
    %562 = vmatprep.mubr.f32.mxu0 0.0
    %563 = vmatmul.mubr.f32.gmra.mxu0 %v381
    %v564 = vpop.f32.mrf.mxu0
    %v565 = vadd.f32 %v344, %v564
    %v566 = vpop.f32.mrf.mxu0
    %567 = vmatprep.mubr.f32.mxu0 0.0
    %568 = vmatmul.mubr.f32.gmra.mxu0 %v384
    %v569 = vpop.f32.mrf.mxu0
    %v570 = vadd.f32 %v344, %v569
    %v571 = vpop.f32.mrf.mxu0
    %572 = vmatprep.mubr.f32.mxu0 0.0
    %573 = vmatmul.mubr.f32.gmra.mxu0 %v387
    %v574 = vpop.f32.mrf.mxu0
    %v575 = vadd.f32 %v344, %v574
    %v576 = vpop.f32.mrf.mxu0
    %577 = vmatprep.mubr.f32.mxu0 0.0
    %578 = vmatmul.mubr.f32.gmra.mxu0 %v390
    %v579 = vpop.f32.mrf.mxu0
    %v580 = vadd.f32 %v344, %v579
    %v581 = vpop.f32.mrf.mxu0
    %582 = vmatprep.mubr.f32.mxu0 0.0
    %583 = vmatmul.mubr.f32.gmra.mxu0 %v393
    %v584 = vpop.f32.mrf.mxu0
    %v585 = vadd.f32 %v344, %v584
    %v586 = vpop.f32.mrf.mxu0
    %587 = vmatprep.mubr.f32.mxu0 0.0
    %588 = vmatmul.mubr.f32.gmra.mxu0 %v396
    %v589 = vpop.f32.mrf.mxu0
    %v590 = vadd.f32 %v344, %v589
    %v591 = vpop.f32.mrf.mxu0
    %592 = vmatprep.mubr.f32.mxu0 0.0
    %593 = vmatmul.mubr.f32.gmra.mxu0 %v399
    %v594 = vpop.f32.mrf.mxu0
    %v595 = vadd.f32 %v344, %v594
    %v596 = vpop.f32.mrf.mxu0
    %597 = vmatprep.mubr.f32.mxu0 0.0
    %598 = vmatmul.mubr.f32.gmra.mxu0 %v402
    %v599 = vpop.f32.mrf.mxu0
    %v600 = vadd.f32 %v344, %v599
    %v601 = vpop.f32.mrf.mxu0
    %602 = vmatprep.mubr.f32.mxu0 0.0
    %603 = vmatmul.mubr.f32.gmra.mxu0 %v405
    %v604 = vpop.f32.mrf.mxu0
    %v605 = vadd.f32 %v344, %v604
    %v606 = vpop.f32.mrf.mxu0
    %607 = vmatprep.mubr.f32.mxu0 0.0
    %608 = vmatmul.mubr.f32.gmra.mxu0 %v408
    %v609 = vpop.f32.mrf.mxu0
    %v610 = vadd.f32 %v344, %v609
    %v611 = vpop.f32.mrf.mxu0
    %612 = vmatprep.mubr.f32.mxu0 0.0
    %613 = vmatmul.mubr.f32.gmra.mxu0 %v411
    %v614 = vpop.f32.mrf.mxu0
    %v615 = vadd.f32 %v344, %v614
    %v616 = vpop.f32.mrf.mxu0
    %617 = vmatprep.mubr.f32.mxu0 0.0
    %618 = vmatmul.mubr.f32.gmra.mxu0 %v414
    %v619 = vpop.f32.mrf.mxu0
    %v620 = vadd.f32 %v344, %v619
    %v621 = vpop.f32.mrf.mxu0
    %622 = vmatprep.mubr.f32.mxu0 0.0
    %623 = vmatmul.mubr.f32.gmra.mxu0 %v417
    %v624 = vpop.f32.mrf.mxu0
    %v625 = vadd.f32 %v344, %v624
    %v626 = vpop.f32.mrf.mxu0
    %627 = vmatprep.mubr.f32.mxu0 0.0
    %628 = vmatmul.mubr.f32.gmra.mxu0 %v420
    %v629 = vpop.f32.mrf.mxu0
    %v630 = vadd.f32 %v344, %v629
    %v631 = vpop.f32.mrf.mxu0
    %632 = vmatprep.mubr.f32.mxu0 0.0
    %633 = vmatmul.mubr.f32.gmra.mxu0 %v423
    %v634 = vpop.f32.mrf.mxu0
    %v635 = vadd.f32 %v344, %v634
    %v636 = vpop.f32.mrf.mxu0
    %637 = vmatprep.mubr.f32.mxu0 0.0
    %638 = vmatmul.mubr.f32.gmra.mxu0 %v426
    %v639 = vpop.f32.mrf.mxu0
    %v640 = vadd.f32 %v344, %v639
    %v641 = vpop.f32.mrf.mxu0
    %642 = vmatprep.mubr.f32.mxu0 0.0
    %643 = vmatmul.mubr.f32.gmra.mxu0 %v429
    %v644 = vpop.f32.mrf.mxu0
    %v645 = vadd.f32 %v344, %v644
    %v646 = vpop.f32.mrf.mxu0
    %647 = vmatprep.mubr.f32.mxu0 0.0
    %648 = vmatmul.mubr.f32.gmra.mxu0 %v432
    %v649 = vpop.f32.mrf.mxu0
    %v650 = vadd.f32 %v344, %v649
    %v651 = vpop.f32.mrf.mxu0
    %652 = vmatprep.mubr.f32.mxu0 0.0
    %653 = vmatmul.mubr.f32.gmra.mxu0 %v435
    %v654 = vpop.f32.mrf.mxu0
    %v655 = vadd.f32 %v344, %v654
    %v656 = vpop.f32.mrf.mxu0
    %657 = vmatprep.mubr.f32.mxu0 0.0
    %658 = vmatmul.mubr.f32.gmra.mxu0 %v438
    %v659 = vpop.f32.mrf.mxu0
    %v660 = vadd.f32 %v344, %v659
    %v661 = vpop.f32.mrf.mxu0
    %662 = vmatprep.mubr.f32.mxu0 0.0
    %663 = vmatmul.mubr.f32.gmra.mxu0 %v441
    %v664 = vpop.f32.mrf.mxu0
    %v665 = vadd.f32 %v344, %v664
    %v666 = vpop.f32.mrf.mxu0
    %667 = vdwg.mxu0
    %v668 = vlaneseq
    %v669 = vshrl.u32 %v668, 7
    %v670 = vadd.s32 %v669, 8
    %v671 = vadd.s32 %v669, 16
    %v672 = vadd.s32 %v669, 24
    %v673 = vadd.s32 %v669, 32
    %v674 = vadd.s32 %v669, 40
    %v675 = vadd.s32 %v669, 48
    %v676 = vadd.s32 %v669, 56
    %v677 = vld [vmem:[#allocation4] sm:$0x3]
    %v678 = vlaneseq
    %v679 = vshrl.u32 %v678, 7
    %v680 = vsub.s32 0, %v679
    %v681 = vrot.slane %v677, %v680
    %v682 = vlaneseq
    %v683 = vshrl.u32 %v682, 7
    %v684 = vsub.s32 1, %v683
    %v685 = vrot.slane %v677, %v684
    %vm686 = vcmp.eq.s32.totalorder %v669, %v681
    %vm687 = vcmp.eq.s32.totalorder %v669, %v685
    %vm688 = vcmp.eq.s32.totalorder %v670, %v681
    %vm689 = vcmp.eq.s32.totalorder %v670, %v685
    %vm690 = vcmp.eq.s32.totalorder %v671, %v681
    %vm691 = vcmp.eq.s32.totalorder %v671, %v685
    %vm692 = vcmp.eq.s32.totalorder %v672, %v681
    %vm693 = vcmp.eq.s32.totalorder %v672, %v685
    %vm694 = vcmp.eq.s32.totalorder %v673, %v681
    %vm695 = vcmp.eq.s32.totalorder %v673, %v685
    %vm696 = vcmp.eq.s32.totalorder %v674, %v681
    %vm697 = vcmp.eq.s32.totalorder %v674, %v685
    %vm698 = vcmp.eq.s32.totalorder %v675, %v681
    %vm699 = vcmp.eq.s32.totalorder %v675, %v685
    %vm700 = vcmp.eq.s32.totalorder %v676, %v681
    %vm701 = vcmp.eq.s32.totalorder %v676, %v685
    %v702 = vsel %vm686, 1, 0
    %v703 = vsel %vm687, 1, 0
    %v704 = vsel %vm688, 1, 0
    %v705 = vsel %vm689, 1, 0
    %v706 = vsel %vm690, 1, 0
    %v707 = vsel %vm691, 1, 0
    %v708 = vsel %vm692, 1, 0
    %v709 = vsel %vm693, 1, 0
    %v710 = vsel %vm694, 1, 0
    %v711 = vsel %vm695, 1, 0
    %v712 = vsel %vm696, 1, 0
    %v713 = vsel %vm697, 1, 0
    %v714 = vsel %vm698, 1, 0
    %v715 = vsel %vm699, 1, 0
    %v716 = vsel %vm700, 1, 0
    %v717 = vsel %vm701, 1, 0
    %v718 = vcvt.s32.f32 %v702
    %v719 = vcvt.s32.f32 %v703
    %v720 = vcvt.s32.f32 %v704
    %v721 = vcvt.s32.f32 %v705
    %v722 = vcvt.s32.f32 %v706
    %v723 = vcvt.s32.f32 %v707
    %v724 = vcvt.s32.f32 %v708
    %v725 = vcvt.s32.f32 %v709
    %v726 = vcvt.s32.f32 %v710
    %v727 = vcvt.s32.f32 %v711
    %v728 = vcvt.s32.f32 %v712
    %v729 = vcvt.s32.f32 %v713
    %v730 = vcvt.s32.f32 %v714
    %v731 = vcvt.s32.f32 %v715
    %v732 = vcvt.s32.f32 %v716
    %v733 = vcvt.s32.f32 %v717
    %v734 = vld [vmem:[#allocation7] sm:$0x3]
    %v735 = vlaneseq
    %v736 = vshrl.u32 %v735, 7
    %v737 = vsub.s32 0, %v736
    %v738 = vrot.slane %v734, %v737
    %v739 = vlaneseq
    %v740 = vshrl.u32 %v739, 7
    %v741 = vsub.s32 1, %v740
    %v742 = vrot.slane %v734, %v741
    %vm743 = vcmp.eq.s32.totalorder %v669, %v738
    %vm744 = vcmp.eq.s32.totalorder %v669, %v742
    %vm745 = vcmp.eq.s32.totalorder %v670, %v738
    %vm746 = vcmp.eq.s32.totalorder %v670, %v742
    %vm747 = vcmp.eq.s32.totalorder %v671, %v738
    %vm748 = vcmp.eq.s32.totalorder %v671, %v742
    %vm749 = vcmp.eq.s32.totalorder %v672, %v738
    %vm750 = vcmp.eq.s32.totalorder %v672, %v742
    %vm751 = vcmp.eq.s32.totalorder %v673, %v738
    %vm752 = vcmp.eq.s32.totalorder %v673, %v742
    %vm753 = vcmp.eq.s32.totalorder %v674, %v738
    %vm754 = vcmp.eq.s32.totalorder %v674, %v742
    %vm755 = vcmp.eq.s32.totalorder %v675, %v738
    %vm756 = vcmp.eq.s32.totalorder %v675, %v742
    %vm757 = vcmp.eq.s32.totalorder %v676, %v738
    %vm758 = vcmp.eq.s32.totalorder %v676, %v742
    %v759 = vsel %vm743, 1, 0
    %v760 = vsel %vm744, 1, 0
    %v761 = vsel %vm745, 1, 0
    %v762 = vsel %vm746, 1, 0
    %v763 = vsel %vm747, 1, 0
    %v764 = vsel %vm748, 1, 0
    %v765 = vsel %vm749, 1, 0
    %v766 = vsel %vm750, 1, 0
    %v767 = vsel %vm751, 1, 0
    %v768 = vsel %vm752, 1, 0
    %v769 = vsel %vm753, 1, 0
    %v770 = vsel %vm754, 1, 0
    %v771 = vsel %vm755, 1, 0
    %v772 = vsel %vm756, 1, 0
    %v773 = vsel %vm757, 1, 0
    %v774 = vsel %vm758, 1, 0
    %v775 = vcvt.s32.f32 %v759
    %v776 = vcvt.s32.f32 %v760
    %v777 = vcvt.s32.f32 %v761
    %v778 = vcvt.s32.f32 %v762
    %v779 = vcvt.s32.f32 %v763
    %v780 = vcvt.s32.f32 %v764
    %v781 = vcvt.s32.f32 %v765
    %v782 = vcvt.s32.f32 %v766
    %v783 = vcvt.s32.f32 %v767
    %v784 = vcvt.s32.f32 %v768
    %v785 = vcvt.s32.f32 %v769
    %v786 = vcvt.s32.f32 %v770
    %v787 = vcvt.s32.f32 %v771
    %v788 = vcvt.s32.f32 %v772
    %v789 = vcvt.s32.f32 %v773
    %v790 = vcvt.s32.f32 %v774
    %791 = vxpose.xlu0.b32.start [1/16] %v718, 128
    %792 = vxpose.xlu0.b32.cont [2/16] %v720, 128
    %793 = vxpose.xlu0.b32.cont [3/16] %v722, 128
    %794 = vxpose.xlu0.b32.cont [4/16] %v724, 128
    %795 = vxpose.xlu0.b32.cont [5/16] %v726, 128
    %796 = vxpose.xlu0.b32.cont [6/16] %v728, 128
    %797 = vxpose.xlu0.b32.cont [7/16] %v730, 128
    %798 = vxpose.xlu0.b32.cont [8/16] %v732, 128
    %799 = vxpose.xlu0.b32.cont [9/16] 0.0, 128
    %800 = vxpose.xlu0.b32.cont [10/16] 0.0, 128
    %801 = vxpose.xlu0.b32.cont [11/16] 0.0, 128
    %802 = vxpose.xlu0.b32.cont [12/16] 0.0, 128
    %803 = vxpose.xlu0.b32.cont [13/16] 0.0, 128
    %804 = vxpose.xlu0.b32.cont [14/16] 0.0, 128
    %805 = vxpose.xlu0.b32.cont [15/16] 0.0, 128
    %806 = vxpose.xlu0.b32.end [16/16] 0.0, 128
    %v807 = vpop.trf.xlu0
    %v808 = vpop.trf.xlu0
    %v809 = vpop.trf.xlu0
    %v810 = vpop.trf.xlu0
    %v811 = vpop.trf.xlu0
    %v812 = vpop.trf.xlu0
    %v813 = vpop.trf.xlu0
    %v814 = vpop.trf.xlu0
    %v815 = vpop.trf.xlu0
    %v816 = vpop.trf.xlu0
    %v817 = vpop.trf.xlu0
    %v818 = vpop.trf.xlu0
    %v819 = vpop.trf.xlu0
    %v820 = vpop.trf.xlu0
    %v821 = vpop.trf.xlu0
    %v822 = vpop.trf.xlu0
    %823 = vxpose.xlu0.b32.start [1/16] %v719, 128
    %824 = vxpose.xlu0.b32.cont [2/16] %v721, 128
    %825 = vxpose.xlu0.b32.cont [3/16] %v723, 128
    %826 = vxpose.xlu0.b32.cont [4/16] %v725, 128
    %827 = vxpose.xlu0.b32.cont [5/16] %v727, 128
    %828 = vxpose.xlu0.b32.cont [6/16] %v729, 128
    %829 = vxpose.xlu0.b32.cont [7/16] %v731, 128
    %830 = vxpose.xlu0.b32.cont [8/16] %v733, 128
    %831 = vxpose.xlu0.b32.cont [9/16] 0.0, 128
    %832 = vxpose.xlu0.b32.cont [10/16] 0.0, 128
    %833 = vxpose.xlu0.b32.cont [11/16] 0.0, 128
    %834 = vxpose.xlu0.b32.cont [12/16] 0.0, 128
    %835 = vxpose.xlu0.b32.cont [13/16] 0.0, 128
    %836 = vxpose.xlu0.b32.cont [14/16] 0.0, 128
    %837 = vxpose.xlu0.b32.cont [15/16] 0.0, 128
    %838 = vxpose.xlu0.b32.end [16/16] 0.0, 128
    %v839 = vpop.trf.xlu0
    %v840 = vpop.trf.xlu0
    %v841 = vpop.trf.xlu0
    %v842 = vpop.trf.xlu0
    %v843 = vpop.trf.xlu0
    %v844 = vpop.trf.xlu0
    %v845 = vpop.trf.xlu0
    %v846 = vpop.trf.xlu0
    %v847 = vpop.trf.xlu0
    %v848 = vpop.trf.xlu0
    %v849 = vpop.trf.xlu0
    %v850 = vpop.trf.xlu0
    %v851 = vpop.trf.xlu0
    %v852 = vpop.trf.xlu0
    %v853 = vpop.trf.xlu0
    %v854 = vpop.trf.xlu0
    %vm855 = vcmask 523264
    %v857 = vsel %vm855, %v807, 0
    %v860 = vsel %vm855, %v808, 0
    %v863 = vsel %vm855, %v809, 0
    %v866 = vsel %vm855, %v810, 0
    %v869 = vsel %vm855, %v811, 0
    %v872 = vsel %vm855, %v812, 0
    %v875 = vsel %vm855, %v813, 0
    %v878 = vsel %vm855, %v814, 0
    %v881 = vsel %vm855, %v815, 0
    %v884 = vsel %vm855, %v816, 0
    %v887 = vsel %vm855, %v817, 0
    %v890 = vsel %vm855, %v818, 0
    %v893 = vsel %vm855, %v819, 0
    %v896 = vsel %vm855, %v820, 0
    %v899 = vsel %vm855, %v821, 0
    %v902 = vsel %vm855, %v822, 0
    %v905 = vsel %vm855, %v839, 0
    %v908 = vsel %vm855, %v840, 0
    %v911 = vsel %vm855, %v841, 0
    %v914 = vsel %vm855, %v842, 0
    %v917 = vsel %vm855, %v843, 0
    %v920 = vsel %vm855, %v844, 0
    %v923 = vsel %vm855, %v845, 0
    %v926 = vsel %vm855, %v846, 0
    %v929 = vsel %vm855, %v847, 0
    %v932 = vsel %vm855, %v848, 0
    %v935 = vsel %vm855, %v849, 0
    %v938 = vsel %vm855, %v850, 0
    %v941 = vsel %vm855, %v851, 0
    %v944 = vsel %vm855, %v852, 0
    %v947 = vsel %vm855, %v853, 0
    %v950 = vsel %vm855, %v854, 0
    %952 = vmatprep.subr.mxu0 0.0
    %953 = vmatpush1.msra.mxu0 0.0
    %954 = vmatprep.subr.mxu0 0.0
    %955 = vmatpush1.msra.mxu0 0.0
    %956 = vmatprep.subr.mxu0 0.0
    %957 = vmatpush1.msra.mxu0 0.0
    %958 = vmatprep.subr.mxu0 0.0
    %959 = vmatpush1.msra.mxu0 0.0
    %960 = vmatprep.subr.mxu0 0.0
    %961 = vmatpush1.msra.mxu0 0.0
    %962 = vmatprep.subr.mxu0 0.0
    %963 = vmatpush1.msra.mxu0 0.0
    %964 = vmatprep.subr.mxu0 0.0
    %965 = vmatpush1.msra.mxu0 0.0
    %966 = vmatprep.subr.mxu0 0.0
    %967 = vmatpush1.msra.mxu0 0.0
    %968 = vmatprep.subr.mxu0 0.0
    %969 = vmatpush1.msra.mxu0 %v304
    %970 = vmatprep.subr.mxu0 0.0
    %971 = vmatpush1.msra.mxu0 %v303
    %972 = vmatprep.subr.mxu0 0.0
    %973 = vmatpush1.msra.mxu0 %v302
    %974 = vmatprep.subr.mxu0 0.0
    %975 = vmatpush1.msra.mxu0 %v301
    %976 = vmatprep.subr.mxu0 0.0
    %977 = vmatpush1.msra.mxu0 %v300
    %978 = vmatprep.subr.mxu0 0.0
    %979 = vmatpush1.msra.mxu0 %v299
    %980 = vmatprep.subr.mxu0 0.0
    %981 = vmatpush1.msra.mxu0 %v298
    %982 = vmatprep.subr.mxu0 0.0
    %983 = vmatpush1.msra.mxu0 %v297
    %984 = vmatprep.subr.mxu0 0.0
    %985 = vmatpush2.msra.mxu0 0.0
    %986 = vmatprep.subr.mxu0 0.0
    %987 = vmatpush2.msra.mxu0 0.0
    %988 = vmatprep.subr.mxu0 0.0
    %989 = vmatpush2.msra.mxu0 0.0
    %990 = vmatprep.subr.mxu0 0.0
    %991 = vmatpush2.msra.mxu0 0.0
    %992 = vmatprep.subr.mxu0 0.0
    %993 = vmatpush2.msra.mxu0 0.0
    %994 = vmatprep.subr.mxu0 0.0
    %995 = vmatpush2.msra.mxu0 0.0
    %996 = vmatprep.subr.mxu0 0.0
    %997 = vmatpush2.msra.mxu0 0.0
    %998 = vmatprep.subr.mxu0 0.0
    %999 = vmatpush2.msra.mxu0 0.0
    %1000 = vmatprep.subr.mxu0 0.0
    %1001 = vmatpush2.msra.mxu0 0.0
    %1002 = vmatprep.subr.mxu0 0.0
    %1003 = vmatpush2.msra.mxu0 0.0
    %1004 = vmatprep.subr.mxu0 0.0
    %1005 = vmatpush2.msra.mxu0 0.0
    %1006 = vmatprep.subr.mxu0 0.0
    %1007 = vmatpush2.msra.mxu0 0.0
    %1008 = vmatprep.subr.mxu0 0.0
    %1009 = vmatpush2.msra.mxu0 0.0
    %1010 = vmatprep.subr.mxu0 0.0
    %1011 = vmatpush2.msra.mxu0 0.0
    %1012 = vmatprep.subr.mxu0 0.0
    %1013 = vmatpush2.msra.mxu0 0.0
    %1014 = vmatprep.subr.mxu0 0.0
    %1015 = vmatpush2.msra.mxu0 0.0
    %1016 = vmatprep.mubr.f32.mxu0 0.0
    %1017 = vmatmul.mubr.f32.gmra.mxu0 %v857
    %v1018 = vpop.f32.mrf.mxu0
    %v1019 = vadd.f32 %v510, %v1018
    %v1020 = vpop.f32.mrf.mxu0
    %1021 = vmatprep.mubr.f32.mxu0 0.0
    %1022 = vmatmul.mubr.f32.gmra.mxu0 %v860
    %v1023 = vpop.f32.mrf.mxu0
    %v1024 = vadd.f32 %v515, %v1023
    %v1025 = vpop.f32.mrf.mxu0
    %1026 = vmatprep.mubr.f32.mxu0 0.0
    %1027 = vmatmul.mubr.f32.gmra.mxu0 %v863
    %v1028 = vpop.f32.mrf.mxu0
    %v1029 = vadd.f32 %v520, %v1028
    %v1030 = vpop.f32.mrf.mxu0
    %1031 = vmatprep.mubr.f32.mxu0 0.0
    %1032 = vmatmul.mubr.f32.gmra.mxu0 %v866
    %v1033 = vpop.f32.mrf.mxu0
    %v1034 = vadd.f32 %v525, %v1033
    %v1035 = vpop.f32.mrf.mxu0
    %1036 = vmatprep.mubr.f32.mxu0 0.0
    %1037 = vmatmul.mubr.f32.gmra.mxu0 %v869
    %v1038 = vpop.f32.mrf.mxu0
    %v1039 = vadd.f32 %v530, %v1038
    %v1040 = vpop.f32.mrf.mxu0
    %1041 = vmatprep.mubr.f32.mxu0 0.0
    %1042 = vmatmul.mubr.f32.gmra.mxu0 %v872
    %v1043 = vpop.f32.mrf.mxu0
    %v1044 = vadd.f32 %v535, %v1043
    %v1045 = vpop.f32.mrf.mxu0
    %1046 = vmatprep.mubr.f32.mxu0 0.0
    %1047 = vmatmul.mubr.f32.gmra.mxu0 %v875
    %v1048 = vpop.f32.mrf.mxu0
    %v1049 = vadd.f32 %v540, %v1048
    %v1050 = vpop.f32.mrf.mxu0
    %1051 = vmatprep.mubr.f32.mxu0 0.0
    %1052 = vmatmul.mubr.f32.gmra.mxu0 %v878
    %v1053 = vpop.f32.mrf.mxu0
    %v1054 = vadd.f32 %v545, %v1053
    %v1055 = vpop.f32.mrf.mxu0
    %1056 = vmatprep.mubr.f32.mxu0 0.0
    %1057 = vmatmul.mubr.f32.gmra.mxu0 %v881
    %v1058 = vpop.f32.mrf.mxu0
    %v1059 = vadd.f32 %v550, %v1058
    %v1060 = vpop.f32.mrf.mxu0
    %1061 = vmatprep.mubr.f32.mxu0 0.0
    %1062 = vmatmul.mubr.f32.gmra.mxu0 %v884
    %v1063 = vpop.f32.mrf.mxu0
    %v1064 = vadd.f32 %v555, %v1063
    %v1065 = vpop.f32.mrf.mxu0
    %1066 = vmatprep.mubr.f32.mxu0 0.0
    %1067 = vmatmul.mubr.f32.gmra.mxu0 %v887
    %v1068 = vpop.f32.mrf.mxu0
    %v1069 = vadd.f32 %v560, %v1068
    %v1070 = vpop.f32.mrf.mxu0
    %1071 = vmatprep.mubr.f32.mxu0 0.0
    %1072 = vmatmul.mubr.f32.gmra.mxu0 %v890
    %v1073 = vpop.f32.mrf.mxu0
    %v1074 = vadd.f32 %v565, %v1073
    %v1075 = vpop.f32.mrf.mxu0
    %1076 = vmatprep.mubr.f32.mxu0 0.0
    %1077 = vmatmul.mubr.f32.gmra.mxu0 %v893
    %v1078 = vpop.f32.mrf.mxu0
    %v1079 = vadd.f32 %v570, %v1078
    %v1080 = vpop.f32.mrf.mxu0
    %1081 = vmatprep.mubr.f32.mxu0 0.0
    %1082 = vmatmul.mubr.f32.gmra.mxu0 %v896
    %v1083 = vpop.f32.mrf.mxu0
    %v1084 = vadd.f32 %v575, %v1083
    %v1085 = vpop.f32.mrf.mxu0
    %1086 = vmatprep.mubr.f32.mxu0 0.0
    %1087 = vmatmul.mubr.f32.gmra.mxu0 %v899
    %v1088 = vpop.f32.mrf.mxu0
    %v1089 = vadd.f32 %v580, %v1088
    %v1090 = vpop.f32.mrf.mxu0
    %1091 = vmatprep.mubr.f32.mxu0 0.0
    %1092 = vmatmul.mubr.f32.gmra.mxu0 %v902
    %v1093 = vpop.f32.mrf.mxu0
    %v1094 = vadd.f32 %v585, %v1093
    %v1095 = vpop.f32.mrf.mxu0
    %1096 = vmatprep.mubr.f32.mxu0 0.0
    %1097 = vmatmul.mubr.f32.gmra.mxu0 %v905
    %v1098 = vpop.f32.mrf.mxu0
    %v1099 = vadd.f32 %v590, %v1098
    %v1100 = vpop.f32.mrf.mxu0
    %1101 = vmatprep.mubr.f32.mxu0 0.0
    %1102 = vmatmul.mubr.f32.gmra.mxu0 %v908
    %v1103 = vpop.f32.mrf.mxu0
    %v1104 = vadd.f32 %v595, %v1103
    %v1105 = vpop.f32.mrf.mxu0
    %1106 = vmatprep.mubr.f32.mxu0 0.0
    %1107 = vmatmul.mubr.f32.gmra.mxu0 %v911
    %v1108 = vpop.f32.mrf.mxu0
    %v1109 = vadd.f32 %v600, %v1108
    %v1110 = vpop.f32.mrf.mxu0
    %1111 = vmatprep.mubr.f32.mxu0 0.0
    %1112 = vmatmul.mubr.f32.gmra.mxu0 %v914
    %v1113 = vpop.f32.mrf.mxu0
    %v1114 = vadd.f32 %v605, %v1113
    %v1115 = vpop.f32.mrf.mxu0
    %1116 = vmatprep.mubr.f32.mxu0 0.0
    %1117 = vmatmul.mubr.f32.gmra.mxu0 %v917
    %v1118 = vpop.f32.mrf.mxu0
    %v1119 = vadd.f32 %v610, %v1118
    %v1120 = vpop.f32.mrf.mxu0
    %1121 = vmatprep.mubr.f32.mxu0 0.0
    %1122 = vmatmul.mubr.f32.gmra.mxu0 %v920
    %v1123 = vpop.f32.mrf.mxu0
    %v1124 = vadd.f32 %v615, %v1123
    %v1125 = vpop.f32.mrf.mxu0
    %1126 = vmatprep.mubr.f32.mxu0 0.0
    %1127 = vmatmul.mubr.f32.gmra.mxu0 %v923
    %v1128 = vpop.f32.mrf.mxu0
    %v1129 = vadd.f32 %v620, %v1128
    %v1130 = vpop.f32.mrf.mxu0
    %1131 = vmatprep.mubr.f32.mxu0 0.0
    %1132 = vmatmul.mubr.f32.gmra.mxu0 %v926
    %v1133 = vpop.f32.mrf.mxu0
    %v1134 = vadd.f32 %v625, %v1133
    %v1135 = vpop.f32.mrf.mxu0
    %1136 = vmatprep.mubr.f32.mxu0 0.0
    %1137 = vmatmul.mubr.f32.gmra.mxu0 %v929
    %v1138 = vpop.f32.mrf.mxu0
    %v1139 = vadd.f32 %v630, %v1138
    %v1140 = vpop.f32.mrf.mxu0
    %1141 = vmatprep.mubr.f32.mxu0 0.0
    %1142 = vmatmul.mubr.f32.gmra.mxu0 %v932
    %v1143 = vpop.f32.mrf.mxu0
    %v1144 = vadd.f32 %v635, %v1143
    %v1145 = vpop.f32.mrf.mxu0
    %1146 = vmatprep.mubr.f32.mxu0 0.0
    %1147 = vmatmul.mubr.f32.gmra.mxu0 %v935
    %v1148 = vpop.f32.mrf.mxu0
    %v1149 = vadd.f32 %v640, %v1148
    %v1150 = vpop.f32.mrf.mxu0
    %1151 = vmatprep.mubr.f32.mxu0 0.0
    %1152 = vmatmul.mubr.f32.gmra.mxu0 %v938
    %v1153 = vpop.f32.mrf.mxu0
    %v1154 = vadd.f32 %v645, %v1153
    %v1155 = vpop.f32.mrf.mxu0
    %1156 = vmatprep.mubr.f32.mxu0 0.0
    %1157 = vmatmul.mubr.f32.gmra.mxu0 %v941
    %v1158 = vpop.f32.mrf.mxu0
    %v1159 = vadd.f32 %v650, %v1158
    %v1160 = vpop.f32.mrf.mxu0
    %1161 = vmatprep.mubr.f32.mxu0 0.0
    %1162 = vmatmul.mubr.f32.gmra.mxu0 %v944
    %v1163 = vpop.f32.mrf.mxu0
    %v1164 = vadd.f32 %v655, %v1163
    %v1165 = vpop.f32.mrf.mxu0
    %1166 = vmatprep.mubr.f32.mxu0 0.0
    %1167 = vmatmul.mubr.f32.gmra.mxu0 %v947
    %v1168 = vpop.f32.mrf.mxu0
    %v1169 = vadd.f32 %v660, %v1168
    %v1170 = vpop.f32.mrf.mxu0
    %1171 = vmatprep.mubr.f32.mxu0 0.0
    %1172 = vmatmul.mubr.f32.gmra.mxu0 %v950
    %v1173 = vpop.f32.mrf.mxu0
    %v1174 = vadd.f32 %v665, %v1173
    %v1175 = vpop.f32.mrf.mxu0
    %1176 = vdwg.mxu0
    %v1177 = vld [vmem:[%s8] sm:$0xff]
    %v1178 = vld [vmem:[%s8 + $0x8] sm:$0xff]
    %v1179 = vld [vmem:[%s8 + $0x10] sm:$0xff]
    %v1180 = vld [vmem:[%s8 + $0x18] sm:$0xff]
    %v1181 = vld [vmem:[%s8 + $0x20] sm:$0xff]
    %v1182 = vld [vmem:[%s8 + $0x28] sm:$0xff]
    %v1183 = vld [vmem:[%s8 + $0x30] sm:$0xff]
    %v1184 = vld [vmem:[%s8 + $0x38] sm:$0xff]
    %v1185 = vld [vmem:[%s8 + $0x40] sm:$0xff]
    %v1186 = vld [vmem:[%s8 + $0x48] sm:$0xff]
    %v1187 = vld [vmem:[%s8 + $0x50] sm:$0xff]
    %v1188 = vld [vmem:[%s8 + $0x58] sm:$0xff]
    %v1189 = vld [vmem:[%s8 + $0x60] sm:$0xff]
    %v1190 = vld [vmem:[%s8 + $0x68] sm:$0xff]
    %v1191 = vld [vmem:[%s8 + $0x70] sm:$0xff]
    %v1192 = vld [vmem:[%s8 + $0x78] sm:$0xff]
    %v1193 = vld [vmem:[#allocation15] sm:$0x1]
    %v1195 = vlaneseq
    %v1196 = vshrl.u32 %v1195, 7
    %v1197 = vsub.s32 0, %v1196
    %v1198 = vrot.slane %v1193, %v1197
    %1200 = vmatprep.subr.mxu0 0.0
    %1201 = vmatpush1.msra.mxu0 %v1192
    %1202 = vmatprep.subr.mxu0 0.0
    %1203 = vmatpush1.msra.mxu0 %v1191
    %1204 = vmatprep.subr.mxu0 0.0
    %1205 = vmatpush1.msra.mxu0 %v1190
    %1206 = vmatprep.subr.mxu0 0.0
    %1207 = vmatpush1.msra.mxu0 %v1189
    %1208 = vmatprep.subr.mxu0 0.0
    %1209 = vmatpush1.msra.mxu0 %v1188
    %1210 = vmatprep.subr.mxu0 0.0
    %1211 = vmatpush1.msra.mxu0 %v1187
    %1212 = vmatprep.subr.mxu0 0.0
    %1213 = vmatpush1.msra.mxu0 %v1186
    %1214 = vmatprep.subr.mxu0 0.0
    %1215 = vmatpush1.msra.mxu0 %v1185
    %1216 = vmatprep.subr.mxu0 0.0
    %1217 = vmatpush1.msra.mxu0 %v1184
    %1218 = vmatprep.subr.mxu0 0.0
    %1219 = vmatpush1.msra.mxu0 %v1183
    %1220 = vmatprep.subr.mxu0 0.0
    %1221 = vmatpush1.msra.mxu0 %v1182
    %1222 = vmatprep.subr.mxu0 0.0
    %1223 = vmatpush1.msra.mxu0 %v1181
    %1224 = vmatprep.subr.mxu0 0.0
    %1225 = vmatpush1.msra.mxu0 %v1180
    %1226 = vmatprep.subr.mxu0 0.0
    %1227 = vmatpush1.msra.mxu0 %v1179
    %1228 = vmatprep.subr.mxu0 0.0
    %1229 = vmatpush1.msra.mxu0 %v1178
    %1230 = vmatprep.subr.mxu0 0.0
    %1231 = vmatpush1.msra.mxu0 %v1177
    %1232 = vmatprep.subr.mxu0 0.0
    %1233 = vmatpush2.msra.mxu0 0.0
    %1234 = vmatprep.subr.mxu0 0.0
    %1235 = vmatpush2.msra.mxu0 0.0
    %1236 = vmatprep.subr.mxu0 0.0
    %1237 = vmatpush2.msra.mxu0 0.0
    %1238 = vmatprep.subr.mxu0 0.0
    %1239 = vmatpush2.msra.mxu0 0.0
    %1240 = vmatprep.subr.mxu0 0.0
    %1241 = vmatpush2.msra.mxu0 0.0
    %1242 = vmatprep.subr.mxu0 0.0
    %1243 = vmatpush2.msra.mxu0 0.0
    %1244 = vmatprep.subr.mxu0 0.0
    %1245 = vmatpush2.msra.mxu0 0.0
    %1246 = vmatprep.subr.mxu0 0.0
    %1247 = vmatpush2.msra.mxu0 0.0
    %1248 = vmatprep.subr.mxu0 0.0
    %1249 = vmatpush2.msra.mxu0 0.0
    %1250 = vmatprep.subr.mxu0 0.0
    %1251 = vmatpush2.msra.mxu0 0.0
    %1252 = vmatprep.subr.mxu0 0.0
    %1253 = vmatpush2.msra.mxu0 0.0
    %1254 = vmatprep.subr.mxu0 0.0
    %1255 = vmatpush2.msra.mxu0 0.0
    %1256 = vmatprep.subr.mxu0 0.0
    %1257 = vmatpush2.msra.mxu0 0.0
    %1258 = vmatprep.subr.mxu0 0.0
    %1259 = vmatpush2.msra.mxu0 0.0
    %1260 = vmatprep.subr.mxu0 0.0
    %1261 = vmatpush2.msra.mxu0 0.0
    %1262 = vmatprep.subr.mxu0 0.0
    %1263 = vmatpush2.msra.mxu0 0.0
    %1264 = vmatprep.mubr.f32.mxu0 0.0
    %1265 = vmatmul.mubr.f32.gmra.mxu0 %v1019
    %v1266 = vpop.f32.mrf.mxu0
    %v1267 = vadd.f32 %v1198, %v1266
    %v1268 = vpop.f32.mrf.mxu0
    %1269 = vmatprep.mubr.f32.mxu0 0.0
    %1270 = vmatmul.mubr.f32.gmra.mxu0 %v1024
    %v1271 = vpop.f32.mrf.mxu0
    %v1272 = vadd.f32 %v1198, %v1271
    %v1273 = vpop.f32.mrf.mxu0
    %1274 = vmatprep.mubr.f32.mxu0 0.0
    %1275 = vmatmul.mubr.f32.gmra.mxu0 %v1029
    %v1276 = vpop.f32.mrf.mxu0
    %v1277 = vadd.f32 %v1198, %v1276
    %v1278 = vpop.f32.mrf.mxu0
    %1279 = vmatprep.mubr.f32.mxu0 0.0
    %1280 = vmatmul.mubr.f32.gmra.mxu0 %v1034
    %v1281 = vpop.f32.mrf.mxu0
    %v1282 = vadd.f32 %v1198, %v1281
    %v1283 = vpop.f32.mrf.mxu0
    %1284 = vmatprep.mubr.f32.mxu0 0.0
    %1285 = vmatmul.mubr.f32.gmra.mxu0 %v1039
    %v1286 = vpop.f32.mrf.mxu0
    %v1287 = vadd.f32 %v1198, %v1286
    %v1288 = vpop.f32.mrf.mxu0
    %1289 = vmatprep.mubr.f32.mxu0 0.0
    %1290 = vmatmul.mubr.f32.gmra.mxu0 %v1044
    %v1291 = vpop.f32.mrf.mxu0
    %v1292 = vadd.f32 %v1198, %v1291
    %v1293 = vpop.f32.mrf.mxu0
    %1294 = vmatprep.mubr.f32.mxu0 0.0
    %1295 = vmatmul.mubr.f32.gmra.mxu0 %v1049
    %v1296 = vpop.f32.mrf.mxu0
    %v1297 = vadd.f32 %v1198, %v1296
    %v1298 = vpop.f32.mrf.mxu0
    %1299 = vmatprep.mubr.f32.mxu0 0.0
    %1300 = vmatmul.mubr.f32.gmra.mxu0 %v1054
    %v1301 = vpop.f32.mrf.mxu0
    %v1302 = vadd.f32 %v1198, %v1301
    %v1303 = vpop.f32.mrf.mxu0
    %1304 = vmatprep.mubr.f32.mxu0 0.0
    %1305 = vmatmul.mubr.f32.gmra.mxu0 %v1059
    %v1306 = vpop.f32.mrf.mxu0
    %v1307 = vadd.f32 %v1198, %v1306
    %v1308 = vpop.f32.mrf.mxu0
    %1309 = vmatprep.mubr.f32.mxu0 0.0
    %1310 = vmatmul.mubr.f32.gmra.mxu0 %v1064
    %v1311 = vpop.f32.mrf.mxu0
    %v1312 = vadd.f32 %v1198, %v1311
    %v1313 = vpop.f32.mrf.mxu0
    %1314 = vmatprep.mubr.f32.mxu0 0.0
    %1315 = vmatmul.mubr.f32.gmra.mxu0 %v1069
    %v1316 = vpop.f32.mrf.mxu0
    %v1317 = vadd.f32 %v1198, %v1316
    %v1318 = vpop.f32.mrf.mxu0
    %1319 = vmatprep.mubr.f32.mxu0 0.0
    %1320 = vmatmul.mubr.f32.gmra.mxu0 %v1074
    %v1321 = vpop.f32.mrf.mxu0
    %v1322 = vadd.f32 %v1198, %v1321
    %v1323 = vpop.f32.mrf.mxu0
    %1324 = vmatprep.mubr.f32.mxu0 0.0
    %1325 = vmatmul.mubr.f32.gmra.mxu0 %v1079
    %v1326 = vpop.f32.mrf.mxu0
    %v1327 = vadd.f32 %v1198, %v1326
    %v1328 = vpop.f32.mrf.mxu0
    %1329 = vmatprep.mubr.f32.mxu0 0.0
    %1330 = vmatmul.mubr.f32.gmra.mxu0 %v1084
    %v1331 = vpop.f32.mrf.mxu0
    %v1332 = vadd.f32 %v1198, %v1331
    %v1333 = vpop.f32.mrf.mxu0
    %1334 = vmatprep.mubr.f32.mxu0 0.0
    %1335 = vmatmul.mubr.f32.gmra.mxu0 %v1089
    %v1336 = vpop.f32.mrf.mxu0
    %v1337 = vadd.f32 %v1198, %v1336
    %v1338 = vpop.f32.mrf.mxu0
    %1339 = vmatprep.mubr.f32.mxu0 0.0
    %1340 = vmatmul.mubr.f32.gmra.mxu0 %v1094
    %v1341 = vpop.f32.mrf.mxu0
    %v1342 = vadd.f32 %v1198, %v1341
    %v1343 = vpop.f32.mrf.mxu0
    %1344 = vmatprep.mubr.f32.mxu0 0.0
    %1345 = vmatmul.mubr.f32.gmra.mxu0 %v1099
    %v1346 = vpop.f32.mrf.mxu0
    %v1347 = vadd.f32 %v1198, %v1346
    %v1348 = vpop.f32.mrf.mxu0
    %1349 = vmatprep.mubr.f32.mxu0 0.0
    %1350 = vmatmul.mubr.f32.gmra.mxu0 %v1104
    %v1351 = vpop.f32.mrf.mxu0
    %v1352 = vadd.f32 %v1198, %v1351
    %v1353 = vpop.f32.mrf.mxu0
    %1354 = vmatprep.mubr.f32.mxu0 0.0
    %1355 = vmatmul.mubr.f32.gmra.mxu0 %v1109
    %v1356 = vpop.f32.mrf.mxu0
    %v1357 = vadd.f32 %v1198, %v1356
    %v1358 = vpop.f32.mrf.mxu0
    %1359 = vmatprep.mubr.f32.mxu0 0.0
    %1360 = vmatmul.mubr.f32.gmra.mxu0 %v1114
    %v1361 = vpop.f32.mrf.mxu0
    %v1362 = vadd.f32 %v1198, %v1361
    %v1363 = vpop.f32.mrf.mxu0
    %1364 = vmatprep.mubr.f32.mxu0 0.0
    %1365 = vmatmul.mubr.f32.gmra.mxu0 %v1119
    %v1366 = vpop.f32.mrf.mxu0
    %v1367 = vadd.f32 %v1198, %v1366
    %v1368 = vpop.f32.mrf.mxu0
    %1369 = vmatprep.mubr.f32.mxu0 0.0
    %1370 = vmatmul.mubr.f32.gmra.mxu0 %v1124
    %v1371 = vpop.f32.mrf.mxu0
    %v1372 = vadd.f32 %v1198, %v1371
    %v1373 = vpop.f32.mrf.mxu0
    %1374 = vmatprep.mubr.f32.mxu0 0.0
    %1375 = vmatmul.mubr.f32.gmra.mxu0 %v1129
    %v1376 = vpop.f32.mrf.mxu0
    %v1377 = vadd.f32 %v1198, %v1376
    %v1378 = vpop.f32.mrf.mxu0
    %1379 = vmatprep.mubr.f32.mxu0 0.0
    %1380 = vmatmul.mubr.f32.gmra.mxu0 %v1134
    %v1381 = vpop.f32.mrf.mxu0
    %v1382 = vadd.f32 %v1198, %v1381
    %v1383 = vpop.f32.mrf.mxu0
    %1384 = vmatprep.mubr.f32.mxu0 0.0
    %1385 = vmatmul.mubr.f32.gmra.mxu0 %v1139
    %v1386 = vpop.f32.mrf.mxu0
    %v1387 = vadd.f32 %v1198, %v1386
    %v1388 = vpop.f32.mrf.mxu0
    %1389 = vmatprep.mubr.f32.mxu0 0.0
    %1390 = vmatmul.mubr.f32.gmra.mxu0 %v1144
    %v1391 = vpop.f32.mrf.mxu0
    %v1392 = vadd.f32 %v1198, %v1391
    %v1393 = vpop.f32.mrf.mxu0
    %1394 = vmatprep.mubr.f32.mxu0 0.0
    %1395 = vmatmul.mubr.f32.gmra.mxu0 %v1149
    %v1396 = vpop.f32.mrf.mxu0
    %v1397 = vadd.f32 %v1198, %v1396
    %v1398 = vpop.f32.mrf.mxu0
    %1399 = vmatprep.mubr.f32.mxu0 0.0
    %1400 = vmatmul.mubr.f32.gmra.mxu0 %v1154
    %v1401 = vpop.f32.mrf.mxu0
    %v1402 = vadd.f32 %v1198, %v1401
    %v1403 = vpop.f32.mrf.mxu0
    %1404 = vmatprep.mubr.f32.mxu0 0.0
    %1405 = vmatmul.mubr.f32.gmra.mxu0 %v1159
    %v1406 = vpop.f32.mrf.mxu0
    %v1407 = vadd.f32 %v1198, %v1406
    %v1408 = vpop.f32.mrf.mxu0
    %1409 = vmatprep.mubr.f32.mxu0 0.0
    %1410 = vmatmul.mubr.f32.gmra.mxu0 %v1164
    %v1411 = vpop.f32.mrf.mxu0
    %v1412 = vadd.f32 %v1198, %v1411
    %v1413 = vpop.f32.mrf.mxu0
    %1414 = vmatprep.mubr.f32.mxu0 0.0
    %1415 = vmatmul.mubr.f32.gmra.mxu0 %v1169
    %v1416 = vpop.f32.mrf.mxu0
    %v1417 = vadd.f32 %v1198, %v1416
    %v1418 = vpop.f32.mrf.mxu0
    %1419 = vmatprep.mubr.f32.mxu0 0.0
    %1420 = vmatmul.mubr.f32.gmra.mxu0 %v1174
    %v1421 = vpop.f32.mrf.mxu0
    %v1422 = vadd.f32 %v1198, %v1421
    %v1423 = vpop.f32.mrf.mxu0
    %1424 = vdwg.mxu0
    %v1425 = vmax.f32 %v1267, 0.0
    %v1426 = vmax.f32 %v1272, 0.0
    %v1427 = vmax.f32 %v1277, 0.0
    %v1428 = vmax.f32 %v1282, 0.0
    %v1429 = vmax.f32 %v1287, 0.0
    %v1430 = vmax.f32 %v1292, 0.0
    %v1431 = vmax.f32 %v1297, 0.0
    %v1432 = vmax.f32 %v1302, 0.0
    %v1433 = vmax.f32 %v1307, 0.0
    %v1434 = vmax.f32 %v1312, 0.0
    %v1435 = vmax.f32 %v1317, 0.0
    %v1436 = vmax.f32 %v1322, 0.0
    %v1437 = vmax.f32 %v1327, 0.0
    %v1438 = vmax.f32 %v1332, 0.0
    %v1439 = vmax.f32 %v1337, 0.0
    %v1440 = vmax.f32 %v1342, 0.0
    %v1441 = vmax.f32 %v1347, 0.0
    %v1442 = vmax.f32 %v1352, 0.0
    %v1443 = vmax.f32 %v1357, 0.0
    %v1444 = vmax.f32 %v1362, 0.0
    %v1445 = vmax.f32 %v1367, 0.0
    %v1446 = vmax.f32 %v1372, 0.0
    %v1447 = vmax.f32 %v1377, 0.0
    %v1448 = vmax.f32 %v1382, 0.0
    %v1449 = vmax.f32 %v1387, 0.0
    %v1450 = vmax.f32 %v1392, 0.0
    %v1451 = vmax.f32 %v1397, 0.0
    %v1452 = vmax.f32 %v1402, 0.0
    %v1453 = vmax.f32 %v1407, 0.0
    %v1454 = vmax.f32 %v1412, 0.0
    %v1455 = vmax.f32 %v1417, 0.0
    %v1456 = vmax.f32 %v1422, 0.0
    %v1457 = vld [vmem:[#allocation3] sm:$0xff]
    %v1458 = vld [vmem:[#allocation3 + $0x8] sm:$0xff]
    %v1459 = vld [vmem:[#allocation3 + $0x10] sm:$0xff]
    %v1460 = vld [vmem:[#allocation3 + $0x18] sm:$0xff]
    %v1461 = vld [vmem:[#allocation3 + $0x20] sm:$0xff]
    %v1462 = vld [vmem:[#allocation3 + $0x28] sm:$0xff]
    %v1463 = vld [vmem:[#allocation3 + $0x30] sm:$0xff]
    %v1464 = vld [vmem:[#allocation3 + $0x38] sm:$0xff]
    %1465 = vmatprep.subr.mxu0 0.0
    %1466 = vmatpush1.msra.mxu0 %v1440
    %1467 = vmatprep.subr.mxu0 0.0
    %1468 = vmatpush1.msra.mxu0 %v1439
    %1469 = vmatprep.subr.mxu0 0.0
    %1470 = vmatpush1.msra.mxu0 %v1438
    %1471 = vmatprep.subr.mxu0 0.0
    %1472 = vmatpush1.msra.mxu0 %v1437
    %1473 = vmatprep.subr.mxu0 0.0
    %1474 = vmatpush1.msra.mxu0 %v1436
    %1475 = vmatprep.subr.mxu0 0.0
    %1476 = vmatpush1.msra.mxu0 %v1435
    %1477 = vmatprep.subr.mxu0 0.0
    %1478 = vmatpush1.msra.mxu0 %v1434
    %1479 = vmatprep.subr.mxu0 0.0
    %1480 = vmatpush1.msra.mxu0 %v1433
    %1481 = vmatprep.subr.mxu0 0.0
    %1482 = vmatpush1.msra.mxu0 %v1432
    %1483 = vmatprep.subr.mxu0 0.0
    %1484 = vmatpush1.msra.mxu0 %v1431
    %1485 = vmatprep.subr.mxu0 0.0
    %1486 = vmatpush1.msra.mxu0 %v1430
    %1487 = vmatprep.subr.mxu0 0.0
    %1488 = vmatpush1.msra.mxu0 %v1429
    %1489 = vmatprep.subr.mxu0 0.0
    %1490 = vmatpush1.msra.mxu0 %v1428
    %1491 = vmatprep.subr.mxu0 0.0
    %1492 = vmatpush1.msra.mxu0 %v1427
    %1493 = vmatprep.subr.mxu0 0.0
    %1494 = vmatpush1.msra.mxu0 %v1426
    %1495 = vmatprep.subr.mxu0 0.0
    %1496 = vmatpush1.msra.mxu0 %v1425
    %1497 = vmatprep.subr.mxu0 0.0
    %1498 = vmatpush2.msra.mxu0 %v1456
    %1499 = vmatprep.subr.mxu0 0.0
    %1500 = vmatpush2.msra.mxu0 %v1455
    %1501 = vmatprep.subr.mxu0 0.0
    %1502 = vmatpush2.msra.mxu0 %v1454
    %1503 = vmatprep.subr.mxu0 0.0
    %1504 = vmatpush2.msra.mxu0 %v1453
    %1505 = vmatprep.subr.mxu0 0.0
    %1506 = vmatpush2.msra.mxu0 %v1452
    %1507 = vmatprep.subr.mxu0 0.0
    %1508 = vmatpush2.msra.mxu0 %v1451
    %1509 = vmatprep.subr.mxu0 0.0
    %1510 = vmatpush2.msra.mxu0 %v1450
    %1511 = vmatprep.subr.mxu0 0.0
    %1512 = vmatpush2.msra.mxu0 %v1449
    %1513 = vmatprep.subr.mxu0 0.0
    %1514 = vmatpush2.msra.mxu0 %v1448
    %1515 = vmatprep.subr.mxu0 0.0
    %1516 = vmatpush2.msra.mxu0 %v1447
    %1517 = vmatprep.subr.mxu0 0.0
    %1518 = vmatpush2.msra.mxu0 %v1446
    %1519 = vmatprep.subr.mxu0 0.0
    %1520 = vmatpush2.msra.mxu0 %v1445
    %1521 = vmatprep.subr.mxu0 0.0
    %1522 = vmatpush2.msra.mxu0 %v1444
    %1523 = vmatprep.subr.mxu0 0.0
    %1524 = vmatpush2.msra.mxu0 %v1443
    %1525 = vmatprep.subr.mxu0 0.0
    %1526 = vmatpush2.msra.mxu0 %v1442
    %1527 = vmatprep.subr.mxu0 0.0
    %1528 = vmatpush2.msra.mxu0 %v1441
    %1529 = vmatprep.mubr.f32.mxu0 %v776
    %1530 = vmatmul.mubr.f32.gmra.mxu0 %v775
    %v1531 = vpop.f32.mrf.mxu0
    %v1532 = vadd.f32 0.0, %v1531
    %v1533 = vpop.f32.mrf.mxu0
    %1534 = vmatprep.mubr.f32.mxu0 %v778
    %1535 = vmatmul.mubr.f32.gmra.mxu0 %v777
    %v1536 = vpop.f32.mrf.mxu0
    %v1537 = vadd.f32 0.0, %v1536
    %v1538 = vpop.f32.mrf.mxu0
    %1539 = vmatprep.mubr.f32.mxu0 %v780
    %1540 = vmatmul.mubr.f32.gmra.mxu0 %v779
    %v1541 = vpop.f32.mrf.mxu0
    %v1542 = vadd.f32 0.0, %v1541
    %v1543 = vpop.f32.mrf.mxu0
    %1544 = vmatprep.mubr.f32.mxu0 %v782
    %1545 = vmatmul.mubr.f32.gmra.mxu0 %v781
    %v1546 = vpop.f32.mrf.mxu0
    %v1547 = vadd.f32 0.0, %v1546
    %v1548 = vpop.f32.mrf.mxu0
    %1549 = vmatprep.mubr.f32.mxu0 %v784
    %1550 = vmatmul.mubr.f32.gmra.mxu0 %v783
    %v1551 = vpop.f32.mrf.mxu0
    %v1552 = vadd.f32 0.0, %v1551
    %v1553 = vpop.f32.mrf.mxu0
    %1554 = vmatprep.mubr.f32.mxu0 %v786
    %1555 = vmatmul.mubr.f32.gmra.mxu0 %v785
    %v1556 = vpop.f32.mrf.mxu0
    %v1557 = vadd.f32 0.0, %v1556
    %v1558 = vpop.f32.mrf.mxu0
    %1559 = vmatprep.mubr.f32.mxu0 %v788
    %1560 = vmatmul.mubr.f32.gmra.mxu0 %v787
    %v1561 = vpop.f32.mrf.mxu0
    %v1562 = vadd.f32 0.0, %v1561
    %v1563 = vpop.f32.mrf.mxu0
    %1564 = vmatprep.mubr.f32.mxu0 %v790
    %1565 = vmatmul.mubr.f32.gmra.mxu0 %v789
    %v1566 = vpop.f32.mrf.mxu0
    %v1567 = vadd.f32 0.0, %v1566
    %v1568 = vpop.f32.mrf.mxu0
    %1569 = vdwg.mxu0
    %v1570 = vadd.f32 %v1457, %v1532
    %v1571 = vadd.f32 %v1458, %v1537
    %v1572 = vadd.f32 %v1459, %v1542
    %v1573 = vadd.f32 %v1460, %v1547
    %v1574 = vadd.f32 %v1461, %v1552
    %v1575 = vadd.f32 %v1462, %v1557
    %v1576 = vadd.f32 %v1463, %v1562
    %v1577 = vadd.f32 %v1464, %v1567
    %1578 = vst [vmem:[#allocation3] sm:$0xff] %v1570
    %1579 = vst [vmem:[#allocation3 + $0x8] sm:$0xff] %v1571
    %1580 = vst [vmem:[#allocation3 + $0x10] sm:$0xff] %v1572
    %1581 = vst [vmem:[#allocation3 + $0x18] sm:$0xff] %v1573
    %1582 = vst [vmem:[#allocation3 + $0x20] sm:$0xff] %v1574
    %1583 = vst [vmem:[#allocation3 + $0x28] sm:$0xff] %v1575
    %1584 = vst [vmem:[#allocation3 + $0x30] sm:$0xff] %v1576
    %1585 = vst [vmem:[#allocation3 + $0x38] sm:$0xff] %v1577
    // Predicated region
    $region86: #{tpu_custom_call.1} parent=1 // pred_check
      %p1586 = pneg %p130
    $region87: #{tpu_custom_call.1} parent=1 // pred_check_branch
      %1588 = sbr.rel (%p1586) target = $region89
    $region88: #{tpu_custom_call.1} parent=1 // pred_region
      %v1589 = vld [vmem:[#allocation2] sm:$0xff]
      %v1590 = vld [vmem:[#allocation2 + $0x8] sm:$0xff]
      %v1591 = vld [vmem:[#allocation2 + $0x10] sm:$0xff]
      %v1592 = vld [vmem:[#allocation2 + $0x18] sm:$0xff]
      %v1593 = vld [vmem:[#allocation2 + $0x20] sm:$0xff]
      %v1594 = vld [vmem:[#allocation2 + $0x28] sm:$0xff]
      %v1595 = vld [vmem:[#allocation2 + $0x30] sm:$0xff]
      %v1596 = vld [vmem:[#allocation2 + $0x38] sm:$0xff]
      %v1597 = vld [vmem:[%s10] sm:$0xff]
      %v1598 = vld [vmem:[%s10 + $0x8] sm:$0xff]
      %v1599 = vld [vmem:[%s10 + $0x10] sm:$0xff]
      %v1600 = vld [vmem:[%s10 + $0x18] sm:$0xff]
      %v1601 = vld [vmem:[%s10 + $0x20] sm:$0xff]
      %v1602 = vld [vmem:[%s10 + $0x28] sm:$0xff]
      %v1603 = vld [vmem:[%s10 + $0x30] sm:$0xff]
      %v1604 = vld [vmem:[%s10 + $0x38] sm:$0xff]
      %v1605 = vld [vmem:[%s10 + $0x40] sm:$0xff]
      %v1606 = vld [vmem:[%s10 + $0x48] sm:$0xff]
      %v1607 = vld [vmem:[%s10 + $0x50] sm:$0xff]
      %v1608 = vld [vmem:[%s10 + $0x58] sm:$0xff]
      %v1609 = vld [vmem:[%s10 + $0x60] sm:$0xff]
      %v1610 = vld [vmem:[%s10 + $0x68] sm:$0xff]
      %v1611 = vld [vmem:[%s10 + $0x70] sm:$0xff]
      %v1612 = vld [vmem:[%s10 + $0x78] sm:$0xff]
      %v1613 = vld [vmem:[#allocation3] sm:$0xff]
      %v1614 = vld [vmem:[#allocation3 + $0x8] sm:$0xff]
      %v1615 = vld [vmem:[#allocation3 + $0x10] sm:$0xff]
      %v1616 = vld [vmem:[#allocation3 + $0x18] sm:$0xff]
      %v1617 = vld [vmem:[#allocation3 + $0x20] sm:$0xff]
      %v1618 = vld [vmem:[#allocation3 + $0x28] sm:$0xff]
      %v1619 = vld [vmem:[#allocation3 + $0x30] sm:$0xff]
      %v1620 = vld [vmem:[#allocation3 + $0x38] sm:$0xff]
      %v1621 = vld [vmem:[%s11] sm:$0xff]
      %v1622 = vld [vmem:[%s11 + $0x8] sm:$0xff]
      %v1623 = vld [vmem:[%s11 + $0x10] sm:$0xff]
      %v1624 = vld [vmem:[%s11 + $0x18] sm:$0xff]
      %v1625 = vld [vmem:[%s11 + $0x20] sm:$0xff]
      %v1626 = vld [vmem:[%s11 + $0x28] sm:$0xff]
      %v1627 = vld [vmem:[%s11 + $0x30] sm:$0xff]
      %v1628 = vld [vmem:[%s11 + $0x38] sm:$0xff]
      %v1629 = vld [vmem:[%s11 + $0x40] sm:$0xff]
      %v1630 = vld [vmem:[%s11 + $0x48] sm:$0xff]
      %v1631 = vld [vmem:[%s11 + $0x50] sm:$0xff]
      %v1632 = vld [vmem:[%s11 + $0x58] sm:$0xff]
      %v1633 = vld [vmem:[%s11 + $0x60] sm:$0xff]
      %v1634 = vld [vmem:[%s11 + $0x68] sm:$0xff]
      %v1635 = vld [vmem:[%s11 + $0x70] sm:$0xff]
      %v1636 = vld [vmem:[%s11 + $0x78] sm:$0xff]
      %1637 = vmatprep.subr.mxu0 0.0
      %1638 = vmatpush1.msra.mxu0 %v1636
      %1639 = vmatprep.subr.mxu0 0.0
      %1640 = vmatpush1.msra.mxu0 %v1635
      %1641 = vmatprep.subr.mxu0 0.0
      %1642 = vmatpush1.msra.mxu0 %v1634
      %1643 = vmatprep.subr.mxu0 0.0
      %1644 = vmatpush1.msra.mxu0 %v1633
      %1645 = vmatprep.subr.mxu0 0.0
      %1646 = vmatpush1.msra.mxu0 %v1632
      %1647 = vmatprep.subr.mxu0 0.0
      %1648 = vmatpush1.msra.mxu0 %v1631
      %1649 = vmatprep.subr.mxu0 0.0
      %1650 = vmatpush1.msra.mxu0 %v1630
      %1651 = vmatprep.subr.mxu0 0.0
      %1652 = vmatpush1.msra.mxu0 %v1629
      %1653 = vmatprep.subr.mxu0 0.0
      %1654 = vmatpush1.msra.mxu0 %v1628
      %1655 = vmatprep.subr.mxu0 0.0
      %1656 = vmatpush1.msra.mxu0 %v1627
      %1657 = vmatprep.subr.mxu0 0.0
      %1658 = vmatpush1.msra.mxu0 %v1626
      %1659 = vmatprep.subr.mxu0 0.0
      %1660 = vmatpush1.msra.mxu0 %v1625
      %1661 = vmatprep.subr.mxu0 0.0
      %1662 = vmatpush1.msra.mxu0 %v1624
      %1663 = vmatprep.subr.mxu0 0.0
      %1664 = vmatpush1.msra.mxu0 %v1623
      %1665 = vmatprep.subr.mxu0 0.0
      %1666 = vmatpush1.msra.mxu0 %v1622
      %1667 = vmatprep.subr.mxu0 0.0
      %1668 = vmatpush1.msra.mxu0 %v1621
      %1669 = vmatprep.subr.mxu0 0.0
      %1670 = vmatpush2.msra.mxu0 0.0
      %1671 = vmatprep.subr.mxu0 0.0
      %1672 = vmatpush2.msra.mxu0 0.0
      %1673 = vmatprep.subr.mxu0 0.0
      %1674 = vmatpush2.msra.mxu0 0.0
      %1675 = vmatprep.subr.mxu0 0.0
      %1676 = vmatpush2.msra.mxu0 0.0
      %1677 = vmatprep.subr.mxu0 0.0
      %1678 = vmatpush2.msra.mxu0 0.0
      %1679 = vmatprep.subr.mxu0 0.0
      %1680 = vmatpush2.msra.mxu0 0.0
      %1681 = vmatprep.subr.mxu0 0.0
      %1682 = vmatpush2.msra.mxu0 0.0
      %1683 = vmatprep.subr.mxu0 0.0
      %1684 = vmatpush2.msra.mxu0 0.0
      %1685 = vmatprep.subr.mxu0 0.0
      %1686 = vmatpush2.msra.mxu0 0.0
      %1687 = vmatprep.subr.mxu0 0.0
      %1688 = vmatpush2.msra.mxu0 0.0
      %1689 = vmatprep.subr.mxu0 0.0
      %1690 = vmatpush2.msra.mxu0 0.0
      %1691 = vmatprep.subr.mxu0 0.0
      %1692 = vmatpush2.msra.mxu0 0.0
      %1693 = vmatprep.subr.mxu0 0.0
      %1694 = vmatpush2.msra.mxu0 0.0
      %1695 = vmatprep.subr.mxu0 0.0
      %1696 = vmatpush2.msra.mxu0 0.0
      %1697 = vmatprep.subr.mxu0 0.0
      %1698 = vmatpush2.msra.mxu0 0.0
      %1699 = vmatprep.subr.mxu0 0.0
      %1700 = vmatpush2.msra.mxu0 0.0
      %1701 = vmatprep.mubr.f32.mxu0 0.0
      %1702 = vmatmul.mubr.f32.gmra.mxu0 %v1613
      %v1703 = vpop.f32.mrf.mxu0
      %v1704 = vadd.f32 0.0, %v1703
      %v1705 = vpop.f32.mrf.mxu0
      %1706 = vmatprep.mubr.f32.mxu0 0.0
      %1707 = vmatmul.mubr.f32.gmra.mxu0 %v1614
      %v1708 = vpop.f32.mrf.mxu0
      %v1709 = vadd.f32 0.0, %v1708
      %v1710 = vpop.f32.mrf.mxu0
      %1711 = vmatprep.mubr.f32.mxu0 0.0
      %1712 = vmatmul.mubr.f32.gmra.mxu0 %v1615
      %v1713 = vpop.f32.mrf.mxu0
      %v1714 = vadd.f32 0.0, %v1713
      %v1715 = vpop.f32.mrf.mxu0
      %1716 = vmatprep.mubr.f32.mxu0 0.0
      %1717 = vmatmul.mubr.f32.gmra.mxu0 %v1616
      %v1718 = vpop.f32.mrf.mxu0
      %v1719 = vadd.f32 0.0, %v1718
      %v1720 = vpop.f32.mrf.mxu0
      %1721 = vmatprep.mubr.f32.mxu0 0.0
      %1722 = vmatmul.mubr.f32.gmra.mxu0 %v1617
      %v1723 = vpop.f32.mrf.mxu0
      %v1724 = vadd.f32 0.0, %v1723
      %v1725 = vpop.f32.mrf.mxu0
      %1726 = vmatprep.mubr.f32.mxu0 0.0
      %1727 = vmatmul.mubr.f32.gmra.mxu0 %v1618
      %v1728 = vpop.f32.mrf.mxu0
      %v1729 = vadd.f32 0.0, %v1728
      %v1730 = vpop.f32.mrf.mxu0
      %1731 = vmatprep.mubr.f32.mxu0 0.0
      %1732 = vmatmul.mubr.f32.gmra.mxu0 %v1619
      %v1733 = vpop.f32.mrf.mxu0
      %v1734 = vadd.f32 0.0, %v1733
      %v1735 = vpop.f32.mrf.mxu0
      %1736 = vmatprep.mubr.f32.mxu0 0.0
      %1737 = vmatmul.mubr.f32.gmra.mxu0 %v1620
      %v1738 = vpop.f32.mrf.mxu0
      %v1739 = vadd.f32 0.0, %v1738
      %v1740 = vpop.f32.mrf.mxu0
      %1741 = vdwg.mxu0
      %1742 = vmatprep.subr.mxu0 0.0
      %1743 = vmatpush1.msra.mxu0 %v1612
      %1744 = vmatprep.subr.mxu0 0.0
      %1745 = vmatpush1.msra.mxu0 %v1611
      %1746 = vmatprep.subr.mxu0 0.0
      %1747 = vmatpush1.msra.mxu0 %v1610
      %1748 = vmatprep.subr.mxu0 0.0
      %1749 = vmatpush1.msra.mxu0 %v1609
      %1750 = vmatprep.subr.mxu0 0.0
      %1751 = vmatpush1.msra.mxu0 %v1608
      %1752 = vmatprep.subr.mxu0 0.0
      %1753 = vmatpush1.msra.mxu0 %v1607
      %1754 = vmatprep.subr.mxu0 0.0
      %1755 = vmatpush1.msra.mxu0 %v1606
      %1756 = vmatprep.subr.mxu0 0.0
      %1757 = vmatpush1.msra.mxu0 %v1605
      %1758 = vmatprep.subr.mxu0 0.0
      %1759 = vmatpush1.msra.mxu0 %v1604
      %1760 = vmatprep.subr.mxu0 0.0
      %1761 = vmatpush1.msra.mxu0 %v1603
      %1762 = vmatprep.subr.mxu0 0.0
      %1763 = vmatpush1.msra.mxu0 %v1602
      %1764 = vmatprep.subr.mxu0 0.0
      %1765 = vmatpush1.msra.mxu0 %v1601
      %1766 = vmatprep.subr.mxu0 0.0
      %1767 = vmatpush1.msra.mxu0 %v1600
      %1768 = vmatprep.subr.mxu0 0.0
      %1769 = vmatpush1.msra.mxu0 %v1599
      %1770 = vmatprep.subr.mxu0 0.0
      %1771 = vmatpush1.msra.mxu0 %v1598
      %1772 = vmatprep.subr.mxu0 0.0
      %1773 = vmatpush1.msra.mxu0 %v1597
      %1774 = vmatprep.subr.mxu0 0.0
      %1775 = vmatpush2.msra.mxu0 0.0
      %1776 = vmatprep.subr.mxu0 0.0
      %1777 = vmatpush2.msra.mxu0 0.0
      %1778 = vmatprep.subr.mxu0 0.0
      %1779 = vmatpush2.msra.mxu0 0.0
      %1780 = vmatprep.subr.mxu0 0.0
      %1781 = vmatpush2.msra.mxu0 0.0
      %1782 = vmatprep.subr.mxu0 0.0
      %1783 = vmatpush2.msra.mxu0 0.0
      %1784 = vmatprep.subr.mxu0 0.0
      %1785 = vmatpush2.msra.mxu0 0.0
      %1786 = vmatprep.subr.mxu0 0.0
      %1787 = vmatpush2.msra.mxu0 0.0
      %1788 = vmatprep.subr.mxu0 0.0
      %1789 = vmatpush2.msra.mxu0 0.0
      %1790 = vmatprep.subr.mxu0 0.0
      %1791 = vmatpush2.msra.mxu0 0.0
      %1792 = vmatprep.subr.mxu0 0.0
      %1793 = vmatpush2.msra.mxu0 0.0
      %1794 = vmatprep.subr.mxu0 0.0
      %1795 = vmatpush2.msra.mxu0 0.0
      %1796 = vmatprep.subr.mxu0 0.0
      %1797 = vmatpush2.msra.mxu0 0.0
      %1798 = vmatprep.subr.mxu0 0.0
      %1799 = vmatpush2.msra.mxu0 0.0
      %1800 = vmatprep.subr.mxu0 0.0
      %1801 = vmatpush2.msra.mxu0 0.0
      %1802 = vmatprep.subr.mxu0 0.0
      %1803 = vmatpush2.msra.mxu0 0.0
      %1804 = vmatprep.subr.mxu0 0.0
      %1805 = vmatpush2.msra.mxu0 0.0
      %1806 = vmatprep.mubr.f32.mxu0 0.0
      %1807 = vmatmul.mubr.f32.gmra.mxu0 %v1589
      %v1808 = vpop.f32.mrf.mxu0
      %v1809 = vadd.f32 %v1704, %v1808
      %v1810 = vpop.f32.mrf.mxu0
      %1811 = vmatprep.mubr.f32.mxu0 0.0
      %1812 = vmatmul.mubr.f32.gmra.mxu0 %v1590
      %v1813 = vpop.f32.mrf.mxu0
      %v1814 = vadd.f32 %v1709, %v1813
      %v1815 = vpop.f32.mrf.mxu0
      %1816 = vmatprep.mubr.f32.mxu0 0.0
      %1817 = vmatmul.mubr.f32.gmra.mxu0 %v1591
      %v1818 = vpop.f32.mrf.mxu0
      %v1819 = vadd.f32 %v1714, %v1818
      %v1820 = vpop.f32.mrf.mxu0
      %1821 = vmatprep.mubr.f32.mxu0 0.0
      %1822 = vmatmul.mubr.f32.gmra.mxu0 %v1592
      %v1823 = vpop.f32.mrf.mxu0
      %v1824 = vadd.f32 %v1719, %v1823
      %v1825 = vpop.f32.mrf.mxu0
      %1826 = vmatprep.mubr.f32.mxu0 0.0
      %1827 = vmatmul.mubr.f32.gmra.mxu0 %v1593
      %v1828 = vpop.f32.mrf.mxu0
      %v1829 = vadd.f32 %v1724, %v1828
      %v1830 = vpop.f32.mrf.mxu0
      %1831 = vmatprep.mubr.f32.mxu0 0.0
      %1832 = vmatmul.mubr.f32.gmra.mxu0 %v1594
      %v1833 = vpop.f32.mrf.mxu0
      %v1834 = vadd.f32 %v1729, %v1833
      %v1835 = vpop.f32.mrf.mxu0
      %1836 = vmatprep.mubr.f32.mxu0 0.0
      %1837 = vmatmul.mubr.f32.gmra.mxu0 %v1595
      %v1838 = vpop.f32.mrf.mxu0
      %v1839 = vadd.f32 %v1734, %v1838
      %v1840 = vpop.f32.mrf.mxu0
      %1841 = vmatprep.mubr.f32.mxu0 0.0
      %1842 = vmatmul.mubr.f32.gmra.mxu0 %v1596
      %v1843 = vpop.f32.mrf.mxu0
      %v1844 = vadd.f32 %v1739, %v1843
      %v1845 = vpop.f32.mrf.mxu0
      %1846 = vdwg.mxu0
      %v1847 = vld [vmem:[%s12] sm:$0x1]
      %v1849 = vlaneseq
      %v1850 = vshrl.u32 %v1849, 7
      %v1851 = vsub.s32 0, %v1850
      %v1852 = vrot.slane %v1847, %v1851
      %v1854 = vadd.f32 %v1809, %v1852
      %v1855 = vadd.f32 %v1814, %v1852
      %v1856 = vadd.f32 %v1819, %v1852
      %v1857 = vadd.f32 %v1824, %v1852
      %v1858 = vadd.f32 %v1829, %v1852
      %v1859 = vadd.f32 %v1834, %v1852
      %v1860 = vadd.f32 %v1839, %v1852
      %v1861 = vadd.f32 %v1844, %v1852
      %v1862 = vmax.f32 %v1854, 0.0
      %v1863 = vmax.f32 %v1855, 0.0
      %v1864 = vmax.f32 %v1856, 0.0
      %v1865 = vmax.f32 %v1857, 0.0
      %v1866 = vmax.f32 %v1858, 0.0
      %v1867 = vmax.f32 %v1859, 0.0
      %v1868 = vmax.f32 %v1860, 0.0
      %v1869 = vmax.f32 %v1861, 0.0
      %1870 = vst [vmem:[#allocation16] sm:$0xff] %v1862
      %1871 = vst [vmem:[#allocation16 + $0x8] sm:$0xff] %v1863
      %1872 = vst [vmem:[#allocation16 + $0x10] sm:$0xff] %v1864
      %1873 = vst [vmem:[#allocation16 + $0x18] sm:$0xff] %v1865
      %1874 = vst [vmem:[#allocation16 + $0x20] sm:$0xff] %v1866
      %1875 = vst [vmem:[#allocation16 + $0x28] sm:$0xff] %v1867
      %1876 = vst [vmem:[#allocation16 + $0x30] sm:$0xff] %v1868
      %1877 = vst [vmem:[#allocation16 + $0x38] sm:$0xff] %v1869
    $region89: #{tpu_custom_call.1} parent=1 // pred_fallthru
      _
    // Predicated region
    $region90: #{tpu_custom_call.1} parent=1 // pred_check
      _
    $region91: #{tpu_custom_call.1} parent=1 // pred_check_branch
      %1879 = sbr.rel (0) target = $region93
    $region92: #{tpu_custom_call.1} parent=1 // pred_region
      %s1881 = ssub.s32 1024, 1024
      %1882 = vsyncadd [#allocation6], %s1881
      %s1883 = sshll.u32 [#allocation16], 4
      %s1884 = int_to_ptr.vmem [resolvable:$true] %s1883
      %1889 = dma.vmem_to_hbm [thread:$0]  %s1884, 1024, %s13, [#allocation6], 128, 128, 8
    $region93: #{tpu_custom_call.1} parent=1 // pred_fallthru
      _
    // Predicated region
    $region94: #{tpu_custom_call.1} parent=1 // pred_check
      _
    $region95: #{tpu_custom_call.1} parent=1 // pred_check_branch
      %1891 = sbr.rel (0) target = $region97
    $region96: #{tpu_custom_call.1} parent=1 // pred_region
      %1892 = dma.done [#allocation6], 1024
    $region97: #{tpu_custom_call.1} parent=1 // pred_fallthru
      _
    %1893 = vsyncpa [#allocation5], 1
    %1894 = vsyncpa [#allocation8], 1
    %1895 = vsyncpa [#allocation11], 1
    %1896 = vsyncpa [#allocation14], 1
    %1897 = vsyncpa [#allocation6], 1

</llo_original>
